<compile_context>
chip_gen: v5e
topology: v5e:2x2
jax: 0.10.0
libtpu: 0.0.40
codegen_flags: <defaults>
</compile_context>

<pallas_src>
import math
import functools

import jax
import jax.numpy as jnp
from jax import lax
from jax.experimental import pallas as pl
from jax.experimental.pallas import tpu as pltpu


def _round_up(n, m):
    return ((n + m - 1) // m) * m


def _pad2(a, rows, cols, dtype=None):
    r, c = a.shape
    out = jnp.pad(a, ((0, rows - r), (0, cols - c)))
    return out.astype(dtype) if dtype is not None else out


def _spec(shape, index_map, *, single_buffer=False):
    """BlockSpec; constant-index operands optionally request single buffering."""
    if single_buffer and hasattr(pl, "Buffered"):
        try:
            return pl.BlockSpec(shape, index_map, pipeline_mode=pl.Buffered(1))
        except TypeError:
            pass
    return pl.BlockSpec(shape, index_map)


# --------------------------- kernel 1: attention ---------------------------

def _attention_kernel(x_ref, wq_ref, bq_ref, wkv_ref, bkv_ref,
                      ctx_ref, attn_ref, q_scratch,
                      *, d_model, di_pad, seq_len, tk, masked):
    kt = pl.program_id(0)
    inv_scale = 1.0 / math.sqrt(float(d_model))
    bf16 = jnp.bfloat16

    # ---- init (kt == 0): Q projection once (stored bf16) + zero ctx accumulator ----
    @pl.when(kt == 0)
    def _init():
        x_bf = x_ref[...].astype(bf16)
        q = jnp.dot(x_bf, wq_ref[...], preferred_element_type=jnp.float32) + bq_ref[...]
        q_scratch[...] = q.astype(bf16)
        ctx_ref[...] = jnp.zeros_like(ctx_ref)

    # ---- K/V for this key block: one fused MXU matmul, sliced from the resident x ----
    k_start = pl.multiple_of(kt * tk, tk)
    xk_bf = x_ref[pl.ds(k_start, tk), :].astype(bf16)
    kv = jnp.dot(xk_bf, wkv_ref[...], preferred_element_type=jnp.float32) + bkv_ref[...]
    k_t = kv[:, :di_pad]
    v_t = kv[:, di_pad:]

    # ---- scores: contract last axis of Q and K (no explicit K transpose) ----
    scores = lax.dot_general(
        q_scratch[...], k_t.astype(bf16),
        dimension_numbers=(((1,), (1,)), ((), ())),
        preferred_element_type=jnp.float32,
    ) * inv_scale                                              # [S_pad, TK]

    if masked:
        # Padded query rows must not contribute to the axis-0 softmax denominator.
        row_ids = lax.broadcasted_iota(jnp.int32, scores.shape, 0)
        scores = jnp.where(row_ids < seq_len, scores, -1e30)

    # ---- softmax over axis 0 (per key column; complete within a key block) ----
    m = jnp.max(scores, axis=0, keepdims=True)
    e = jnp.exp(scores - m)
    denom = jnp.sum(e, axis=0, keepdims=True)
    # approx=False: EUP reciprocal estimate + one Newton refinement (near-exact).
    attn_blk = e * pl.reciprocal(denom, approx=False)

    if masked:
        # Padded key columns would multiply bias-only (non-zero) V rows: zero them.
        col_ids = lax.broadcasted_iota(jnp.int32, scores.shape, 1) + kt * tk
        attn_blk = jnp.where(col_ids < seq_len, attn_blk, 0.0)

    attn_ref[...] = attn_blk
    ctx_ref[...] += jnp.dot(attn_blk.astype(bf16), v_t.astype(bf16),
                            preferred_element_type=jnp.float32)


# --------------------- kernel 2: w0 / residual / FFN -----------------------

def _ffn_kernel(ctx_ref, x_ref, w0_ref, b0_ref, w1_ref, b1_ref, w2_ref, b2_ref,
                out_ref):
    bf16 = jnp.bfloat16
    x_blk = x_ref[...]
    sa = jnp.dot(ctx_ref[...].astype(bf16), w0_ref[...],
                 preferred_element_type=jnp.float32) + b0_ref[...]
    res = sa + x_blk
    h = jnp.dot(res.astype(bf16), w1_ref[...],
                preferred_element_type=jnp.float32) + b1_ref[...]
    h = jnp.maximum(h, 0.0)                                    # ReLU in f32 (v5e VPU has no bf16)
    ff = jnp.dot(h.astype(bf16), w2_ref[...],
                 preferred_element_type=jnp.float32) + b2_ref[...]
    out_ref[...] = ff + res


# ------------------------------- wrapper -----------------------------------

def _forward_padded(x_p, wq, bq, wkv, bkv, w0, b0, w1, b1, w2, b2, *,
                    d_model, seq_len, S_pad, D_pad, DI_pad, H_pad, TK, TM,
                    single_buffer):
    n_kt = S_pad // TK
    masked = (S_pad != seq_len)

    def const(shape):
        return _spec(shape, lambda i: (0, 0), single_buffer=single_buffer)

    def _vmem_limit(resident_bytes):
        # 2x for double-buffered blocks + headroom for compiler internal scratch;
        # clamp to the smallest physical VMEM across generations (v7x: 64 MiB).
        return int(min(max(2 * resident_bytes + (4 << 20), 16 << 20), 64 << 20))

    # ------------------------- attention call -------------------------
    attn_resident = int(
        x_p.nbytes + wq.nbytes + bq.nbytes + wkv.nbytes + bkv.nbytes
        + S_pad * DI_pad * 4            # ctx output (resident accumulator)
        + 2 * S_pad * TK * 4            # attn key-block output (double-buffered)
        + S_pad * DI_pad * 2            # bf16 Q scratch
        + 4 * S_pad * TK * 4)           # score / exp temporaries
    attn_cost = pl.CostEstimate(
        flops=int(2 * S_pad * D_pad * 3 * DI_pad + 2 * S_pad * S_pad * DI_pad * 2),
        transcendentals=int(S_pad * S_pad),
        bytes_accessed=int(x_p.nbytes + wq.nbytes + wkv.nbytes
                           + S_pad * DI_pad * 4 + S_pad * S_pad * 4))

    attn_kernel = functools.partial(
        _attention_kernel, d_model=d_model, di_pad=DI_pad,
        seq_len=seq_len, tk=TK, masked=masked)

    ctx, attn = pl.pallas_call(
        attn_kernel,
        out_shape=(jax.ShapeDtypeStruct((S_pad, DI_pad), jnp.float32),
                   jax.ShapeDtypeStruct((S_pad, S_pad), jnp.float32)),
        grid=(n_kt,),
        in_specs=[
            const((S_pad, D_pad)),        # x (resident; key block sliced in-kernel)
            const((D_pad, DI_pad)),       # wq
            const((1, DI_pad)),           # bq
            const((D_pad, 2 * DI_pad)),   # wk || wv (fused)
            const((1, 2 * DI_pad)),       # bk || bv (fused)
        ],
        out_specs=(
            pl.BlockSpec((S_pad, DI_pad), lambda i: (0, 0)),  # ctx accumulator (resident)
            pl.BlockSpec((S_pad, TK), lambda i: (0, i)),      # attention-map key block
        ),
        scratch_shapes=[pltpu.VMEM((S_pad, DI_pad), jnp.bfloat16)],   # Q (bf16)
        compiler_params=pltpu.CompilerParams(
            dimension_semantics=("arbitrary",),               # key axis is a reduction
            vmem_limit_bytes=_vmem_limit(attn_resident)),
        cost_estimate=attn_cost,
    )(x_p, wq, bq, wkv, bkv)

    # ----------------- w0 / residual / FFN call (row tiles) -----------------
    ffn_resident = int(
        2 * TM * (DI_pad + 2 * D_pad + 2 * H_pad) * 4
        + w0.nbytes + b0.nbytes + w1.nbytes + b1.nbytes + w2.nbytes + b2.nbytes)
    ffn_cost = pl.CostEstimate(
        flops=int(2 * S_pad * DI_pad * D_pad + 4 * S_pad * D_pad * H_pad),
        transcendentals=0,
        bytes_accessed=int(S_pad * DI_pad * 4 + x_p.nbytes + w0.nbytes + w1.nbytes
                           + w2.nbytes + S_pad * D_pad * 4))

    out_p = pl.pallas_call(
        _ffn_kernel,
        out_shape=jax.ShapeDtypeStruct((S_pad, D_pad), jnp.float32),
        grid=(S_pad // TM,),
        in_specs=[
            pl.BlockSpec((TM, DI_pad), lambda i: (i, 0)),     # ctx row tile
            pl.BlockSpec((TM, D_pad), lambda i: (i, 0)),      # x row tile (residual)
            const((DI_pad, D_pad)), const((1, D_pad)),        # w0, b0
            const((D_pad, H_pad)),  const((1, H_pad)),        # w1, b1
            const((H_pad, D_pad)),  const((1, D_pad)),        # w2, b2
        ],
        out_specs=pl.BlockSpec((TM, D_pad), lambda i: (i, 0)),
        compiler_params=pltpu.CompilerParams(
            dimension_semantics=("parallel",),                # independent row tiles (2 TCs on v7x)
            vmem_limit_bytes=_vmem_limit(ffn_resident)),
        cost_estimate=ffn_cost,
    )(ctx, x_p, w0, b0, w1, b1, w2, b2)

    return out_p, attn


def transformer_layer(x, params, *, d_model, d_internal):
    """x: [seq, d_model] float32. params: pre-transposed weights [in, out], biases [1, out]."""
    S, D = x.shape
    assert D == d_model

    # Lane-dense padded feature dims (multiples of 128).
    D_pad = _round_up(d_model, 128)
    DI_pad = _round_up(d_internal, 128)
    H_pad = _round_up(2 * d_model, 128)

    # Key-axis tile: 256 fills the 256-wide v6e/v7x MXU; 128 keeps padding small for
    # short sequences. The sequence is zero-padded to a tile multiple (masked exactly
    # in-kernel) so the grid stays multi-step and pipelined.
    TK = 256 if S >= 256 else 128
    S_pad = _round_up(S, TK)
    TM = min(256, S_pad)          # FFN row tile (always divides S_pad)

    bf16 = jnp.bfloat16
    x_p = _pad2(x, S_pad, D_pad)                                    # f32
    wq = _pad2(params["wq"], D_pad, DI_pad, bf16)
    bq = _pad2(params["bq"], 1, DI_pad)
    wkv = jnp.concatenate([_pad2(params["wk"], D_pad, DI_pad, bf16),
                           _pad2(params["wv"], D_pad, DI_pad, bf16)], axis=1)
    bkv = jnp.concatenate([_pad2(params["bk"], 1, DI_pad),
                           _pad2(params["bv"], 1, DI_pad)], axis=1)
    w0 = _pad2(params["w0"], DI_pad, D_pad, bf16); b0 = _pad2(params["b0"], 1, D_pad)
    w1 = _pad2(params["w1"], D_pad, H_pad, bf16);  b1 = _pad2(params["b1"], 1, H_pad)
    w2 = _pad2(params["w2"], H_pad, D_pad, bf16);  b2 = _pad2(params["b2"], 1, D_pad)

    args = (x_p, wq, bq, wkv, bkv, w0, b0, w1, b1, w2, b2)
    kwargs = dict(d_model=d_model, seq_len=S, S_pad=S_pad, D_pad=D_pad,
                  DI_pad=DI_pad, H_pad=H_pad, TK=TK, TM=TM)

    try:
        out_p, attn_p = _forward_padded(*args, single_buffer=True, **kwargs)
        jax.block_until_ready((out_p, attn_p))
    except Exception:
        # pl.Buffered(1) single-buffering not supported by this jax/Mosaic version;
        # retry with default (double-buffered) BlockSpecs.
        out_p, attn_p = _forward_padded(*args, single_buffer=False, **kwargs)

    return out_p[:S, :d_model], attn_p[:S, :S]


# --------------------------- params & references ---------------------------

def init_params(key, d_model, d_internal):
    """Deterministic synthetic init. Linear weights stored pre-transposed as
    [in_features, out_features]; biases as [1, out_features]."""
    ks = jax.random.split(key, 12)

    def linear(kw, kb, fan_in, fan_out):
        bound = 1.0 / math.sqrt(fan_in)
        w = jax.random.uniform(kw, (fan_in, fan_out), jnp.float32, -bound, bound)
        b = jax.random.uniform(kb, (1, fan_out), jnp.float32, -bound, bound)
        return w, b

    wq, bq = linear(ks[0], ks[1], d_model, d_internal)
    wk, bk = linear(ks[2], ks[3], d_model, d_internal)
    wv, bv = linear(ks[4], ks[5], d_model, d_internal)
    w0, b0 = linear(ks[6], ks[7], d_internal, d_model)
    w1, b1 = linear(ks[8], ks[9], d_model, 2 * d_model)
    w2, b2 = linear(ks[10], ks[11], 2 * d_model, d_model)
    return dict(wq=wq, bq=bq, wk=wk, bk=bk, wv=wv, bv=bv,
                w0=w0, b0=b0, w1=w1, b1=b1, w2=w2, b2=b2)


def reference_forward_f32(x, p, d_model):
    """Pure-JAX f32 reference mirroring the PyTorch forward."""
    q = x @ p["wq"] + p["bq"]
    k = x @ p["wk"] + p["bk"]
    v = x @ p["wv"] + p["bv"]
    scores = (q @ k.T) / math.sqrt(d_model)
    attn = jax.nn.softmax(scores, axis=0)
    sa = (attn @ v) @ p["w0"] + p["b0"]
    res = sa + x
    h = jnp.maximum(res @ p["w1"] + p["b1"], 0.0)
    ff = h @ p["w2"] + p["b2"]
    return ff + res, attn


def reference_forward_bf16(x, p, d_model):
    """Reference with the same bf16-operand / f32-accumulation matmuls as the kernel."""
    bf = lambda a: a.astype(jnp.bfloat16)
    dot = lambda a, b: jnp.dot(bf(a), bf(b), preferred_element_type=jnp.float32)
    inv_scale = 1.0 / math.sqrt(float(d_model))
    q = dot(x, p["wq"]) + p["bq"]
    k = dot(x, p["wk"]) + p["bk"]
    v = dot(x, p["wv"]) + p["bv"]
    scores = lax.dot_general(bf(q), bf(k), (((1,), (1,)), ((), ())),
                             preferred_element_type=jnp.float32) * inv_scale
    m = jnp.max(scores, axis=0, keepdims=True)
    e = jnp.exp(scores - m)
    attn = e * (1.0 / jnp.sum(e, axis=0, keepdims=True))
    ctx = dot(attn, v)
    sa = dot(ctx, p["w0"]) + p["b0"]
    res = sa + x
    h = jnp.maximum(dot(res, p["w1"]) + p["b1"], 0.0)
    ff = dot(h, p["w2"]) + p["b2"]
    return ff + res, attn


if __name__ == "__main__":
    seq = 8
    d_model = 32
    d_internal = 16

    key = jax.random.PRNGKey(0)
    kx, kp = jax.random.split(key)
    x = jax.random.normal(kx, (seq, d_model), dtype=jnp.float32)
    params = init_params(kp, d_model, d_internal)

    out, attn = transformer_layer(x, params, d_model=d_model, d_internal=d_internal)
    jax.block_until_ready((out, attn))

    assert out.shape == (seq, d_model)
    assert attn.shape == (seq, seq)

    # Tight check against a reference using identical bf16-MXU / f32-accum math.
    ref_out_bf, ref_attn_bf = reference_forward_bf16(x, params, d_model)
    assert jnp.allclose(out, ref_out_bf, atol=1e-4, rtol=1e-4)
    assert jnp.allclose(attn, ref_attn_bf, atol=1e-5, rtol=1e-5)

    # Loose check against the pure-f32 PyTorch-equivalent reference
    # (bf16 matmul inputs cost a few mantissa bits; accumulation stays f32).
    ref_out_32, ref_attn_32 = reference_forward_f32(x, params, d_model)
    assert jnp.allclose(out, ref_out_32, atol=1e-1, rtol=1e-1)
    assert jnp.allclose(attn, ref_attn_32, atol=1e-2, rtol=1e-2)

    print("KERNEL_OK")
</pallas_src>

<mosaic_0001>
module attributes {stable_mosaic.version = 11 : i64} {
  func.func @_attention_kernel(%arg0: i32, %arg1: memref<128x128xf32, #tpu.memory_space<vmem>>, %arg2: memref<128x128xbf16, #tpu.memory_space<vmem>>, %arg3: memref<1x128xf32, #tpu.memory_space<vmem>>, %arg4: memref<128x256xbf16, #tpu.memory_space<vmem>>, %arg5: memref<1x256xf32, #tpu.memory_space<vmem>>, %arg6: memref<128x128xf32, #tpu.memory_space<vmem>>, %arg7: memref<128x128xf32, #tpu.memory_space<vmem>>, %arg8: memref<128x128xbf16, #tpu.memory_space<vmem>>) attributes {dimension_semantics = [#tpu.dimension_semantics<arbitrary>], iteration_bounds = array<i64: 1>, scalar_prefetch = 0 : i64, scratch_operands = 1 : i64, tpu.core_type = #tpu.core_type<tc>, window_params = [{pipeline_mode = #tpu.pipeline_mode<synchronous>, transform_indices = @transform_0, window_bounds = array<i64: 128, 128>}, {pipeline_mode = #tpu.pipeline_mode<synchronous>, transform_indices = @transform_1, window_bounds = array<i64: 128, 128>}, {pipeline_mode = #tpu.pipeline_mode<synchronous>, transform_indices = @transform_2, window_bounds = array<i64: 1, 128>}, {pipeline_mode = #tpu.pipeline_mode<synchronous>, transform_indices = @transform_3, window_bounds = array<i64: 128, 256>}, {pipeline_mode = #tpu.pipeline_mode<synchronous>, transform_indices = @transform_4, window_bounds = array<i64: 1, 256>}, {pipeline_mode = #tpu.pipeline_mode<synchronous>, transform_indices = @transform_5, window_bounds = array<i64: 128, 128>}, {transform_indices = @transform_6, window_bounds = array<i64: 128, 128>}]} {
    %c0_i32 = arith.constant 0 : i32
    %0 = arith.cmpi eq, %arg0, %c0_i32 : i32
    %1 = arith.extui %0 : i1 to i32
    %c0_i32_0 = arith.constant 0 : i32
    %2 = arith.cmpi ne, %1, %c0_i32_0 : i32
    scf.if %2 {
      %c0_22 = arith.constant 0 : index
      %c0_23 = arith.constant 0 : index
      %50 = vector.load %arg1[%c0_22, %c0_23] : memref<128x128xf32, #tpu.memory_space<vmem>>, vector<128x128xf32>
      %51 = arith.truncf %50 : vector<128x128xf32> to vector<128x128xbf16>
      %c0_24 = arith.constant 0 : index
      %c0_25 = arith.constant 0 : index
      %52 = vector.load %arg2[%c0_24, %c0_25] : memref<128x128xbf16, #tpu.memory_space<vmem>>, vector<128x128xbf16>
      %cst_26 = arith.constant dense<0.000000e+00> : vector<128x128xf32>
      %53 = tpu.matmul %51, %52, %cst_26 {dimension_numbers = #tpu.dot_dimension_numbers<[1], [0], [0], [1], [0, 0, 1, 1], [], []>} : vector<128x128xbf16>, vector<128x128xbf16>, vector<128x128xf32> -> vector<128x128xf32>
      %c0_27 = arith.constant 0 : index
      %c0_28 = arith.constant 0 : index
      %54 = vector.load %arg3[%c0_27, %c0_28] : memref<1x128xf32, #tpu.memory_space<vmem>>, vector<1x128xf32>
      %55 = vector.broadcast %54 : vector<1x128xf32> to vector<128x128xf32>
      %56 = arith.addf %53, %55 : vector<128x128xf32>
      %57 = arith.truncf %56 : vector<128x128xf32> to vector<128x128xbf16>
      %c0_29 = arith.constant 0 : index
      %c0_30 = arith.constant 0 : index
      %58 = vector.load %arg8[%c0_29, %c0_30] : memref<128x128xbf16, #tpu.memory_space<vmem>>, vector<128x128xbf16>
      tpu.vector_store %arg8[%c0_29, %c0_30], %57 {strides = array<i32>} : memref<128x128xbf16, #tpu.memory_space<vmem>>, vector<128x128xbf16>,
      %cst_31 = arith.constant 0.000000e+00 : f32
      %59 = vector.broadcast %cst_31 : f32 to vector<128x128xf32>
      %c0_32 = arith.constant 0 : index
      %c0_33 = arith.constant 0 : index
      %60 = vector.load %arg6[%c0_32, %c0_33] : memref<128x128xf32, #tpu.memory_space<vmem>>, vector<128x128xf32>
      tpu.vector_store %arg6[%c0_32, %c0_33], %59 {strides = array<i32>} : memref<128x128xf32, #tpu.memory_space<vmem>>, vector<128x128xf32>,
    } else {
    }
    %c128_i32 = arith.constant 128 : i32
    %3 = arith.muli %arg0, %c128_i32 : i32
    %4 = tpu.assume_multiple %3, 128 : i32
    %5 = arith.index_cast %4 : i32 to index
    %c0 = arith.constant 0 : index
    %6 = vector.load %arg1[%5, %c0] : memref<128x128xf32, #tpu.memory_space<vmem>>, vector<128x128xf32>
    %7 = arith.truncf %6 : vector<128x128xf32> to vector<128x128xbf16>
    %c0_1 = arith.constant 0 : index
    %c0_2 = arith.constant 0 : index
    %8 = vector.load %arg4[%c0_1, %c0_2] : memref<128x256xbf16, #tpu.memory_space<vmem>>, vector<128x256xbf16>
    %cst = arith.constant dense<0.000000e+00> : vector<128x256xf32>
    %9 = tpu.matmul %7, %8, %cst {dimension_numbers = #tpu.dot_dimension_numbers<[1], [0], [0], [1], [0, 0, 1, 1], [], []>} : vector<128x128xbf16>, vector<128x256xbf16>, vector<128x256xf32> -> vector<128x256xf32>
    %c0_3 = arith.constant 0 : index
    %c0_4 = arith.constant 0 : index
    %10 = vector.load %arg5[%c0_3, %c0_4] : memref<1x256xf32, #tpu.memory_space<vmem>>, vector<1x256xf32>
    %11 = vector.broadcast %10 : vector<1x256xf32> to vector<128x256xf32>
    %12 = arith.addf %9, %11 : vector<128x256xf32>
    %13 = vector.extract_strided_slice %12 {offsets = [0, 0], sizes = [128, 128], strides = [1, 1]} : vector<128x256xf32> to vector<128x128xf32>
    %14 = vector.extract_strided_slice %12 {offsets = [0, 128], sizes = [128, 128], strides = [1, 1]} : vector<128x256xf32> to vector<128x128xf32>
    %c0_5 = arith.constant 0 : index
    %c0_6 = arith.constant 0 : index
    %15 = vector.load %arg8[%c0_5, %c0_6] : memref<128x128xbf16, #tpu.memory_space<vmem>>, vector<128x128xbf16>
    %16 = arith.truncf %13 : vector<128x128xf32> to vector<128x128xbf16>
    %cst_7 = arith.constant dense<0.000000e+00> : vector<128x128xf32>
    %17 = tpu.matmul %15, %16, %cst_7 {dimension_numbers = #tpu.dot_dimension_numbers<[1], [1], [0], [0], [0, 0, 1, 0], [], []>} : vector<128x128xbf16>, vector<128x128xbf16>, vector<128x128xf32> -> vector<128x128xf32>
    %cst_8 = arith.constant 0.176776692 : f32
    %18 = vector.broadcast %cst_8 : f32 to vector<128x128xf32>
    %19 = arith.mulf %17, %18 : vector<128x128xf32>
    %20 = tpu.iota {dimensions = array<i32: 0>} : vector<128x128xi32>
    %c8_i32 = arith.constant 8 : i32
    %21 = vector.broadcast %c8_i32 : i32 to vector<128x128xi32>
    %22 = arith.cmpi slt, %20, %21 : vector<128x128xi32>
    %cst_9 = arith.constant -1.000000e+30 : f32
    %23 = vector.broadcast %cst_9 : f32 to vector<128x128xf32>
    %24 = arith.select %22, %19, %23 : vector<128x128xi1>, vector<128x128xf32>
    %cst_10 = arith.constant dense<0xFF800000> : vector<128xf32>
    %25 = vector.multi_reduction <maximumf>, %24, %cst_10 [0] : vector<128x128xf32> to vector<128xf32>
    %26 = vector.shape_cast %25 : vector<128xf32> to vector<1x128xf32>
    %27 = vector.broadcast %26 : vector<1x128xf32> to vector<128x128xf32>
    %28 = arith.subf %24, %27 : vector<128x128xf32>
    %29 = math.exp %28 : vector<128x128xf32>
    %cst_11 = arith.constant dense<0.000000e+00> : vector<128xf32>
    %30 = vector.multi_reduction <add>, %29, %cst_11 [0] : vector<128x128xf32> to vector<128xf32>
    %31 = vector.shape_cast %30 : vector<128xf32> to vector<1x128xf32>
    %32 = tpu.reciprocal %31 : vector<1x128xf32> -> vector<1x128xf32>
    %33 = vector.broadcast %32 : vector<1x128xf32> to vector<128x128xf32>
    %34 = arith.mulf %29, %33 : vector<128x128xf32>
    %35 = tpu.iota {dimensions = array<i32: 1>} : vector<128x128xi32>
    %c128_i32_12 = arith.constant 128 : i32
    %36 = arith.muli %arg0, %c128_i32_12 : i32
    %37 = vector.broadcast %36 : i32 to vector<128x128xi32>
    %38 = arith.addi %35, %37 : vector<128x128xi32>
    %c8_i32_13 = arith.constant 8 : i32
    %39 = vector.broadcast %c8_i32_13 : i32 to vector<128x128xi32>
    %40 = arith.cmpi slt, %38, %39 : vector<128x128xi32>
    %cst_14 = arith.constant 0.000000e+00 : f32
    %41 = vector.broadcast %cst_14 : f32 to vector<128x128xf32>
    %42 = arith.select %40, %34, %41 : vector<128x128xi1>, vector<128x128xf32>
    %c0_15 = arith.constant 0 : index
    %c0_16 = arith.constant 0 : index
    %43 = vector.load %arg7[%c0_15, %c0_16] : memref<128x128xf32, #tpu.memory_space<vmem>>, vector<128x128xf32>
    tpu.vector_store %arg7[%c0_15, %c0_16], %42 {strides = array<i32>} : memref<128x128xf32, #tpu.memory_space<vmem>>, vector<128x128xf32>,
    %c0_17 = arith.constant 0 : index
    %c0_18 = arith.constant 0 : index
    %44 = vector.load %arg6[%c0_17, %c0_18] : memref<128x128xf32, #tpu.memory_space<vmem>>, vector<128x128xf32>
    %45 = arith.truncf %42 : vector<128x128xf32> to vector<128x128xbf16>
    %46 = arith.truncf %14 : vector<128x128xf32> to vector<128x128xbf16>
    %cst_19 = arith.constant dense<0.000000e+00> : vector<128x128xf32>
    %47 = tpu.matmul %45, %46, %cst_19 {dimension_numbers = #tpu.dot_dimension_numbers<[1], [0], [0], [1], [0, 0, 1, 1], [], []>} : vector<128x128xbf16>, vector<128x128xbf16>, vector<128x128xf32> -> vector<128x128xf32>
    %48 = arith.addf %44, %47 : vector<128x128xf32>
    %c0_20 = arith.constant 0 : index
    %c0_21 = arith.constant 0 : index
    %49 = vector.load %arg6[%c0_20, %c0_21] : memref<128x128xf32, #tpu.memory_space<vmem>>, vector<128x128xf32>
    tpu.vector_store %arg6[%c0_20, %c0_21], %48 {strides = array<i32>} : memref<128x128xf32, #tpu.memory_space<vmem>>, vector<128x128xf32>,
    return
  }
  func.func @transform_0(%arg0: i32) -> (i32, i32) {
    %c0_i32 = arith.constant 0 : i32
    %c0_i32_0 = arith.constant 0 : i32
    %c0_i32_1 = arith.constant 0 : i32
    return %c0_i32, %c0_i32_0 : i32, i32
  }
  func.func @transform_1(%arg0: i32) -> (i32, i32) {
    %c0_i32 = arith.constant 0 : i32
    %c0_i32_0 = arith.constant 0 : i32
    %c0_i32_1 = arith.constant 0 : i32
    return %c0_i32, %c0_i32_0 : i32, i32
  }
  func.func @transform_2(%arg0: i32) -> (i32, i32) {
    %c0_i32 = arith.constant 0 : i32
    %c0_i32_0 = arith.constant 0 : i32
    %c0_i32_1 = arith.constant 0 : i32
    return %c0_i32, %c0_i32_0 : i32, i32
  }
  func.func @transform_3(%arg0: i32) -> (i32, i32) {
    %c0_i32 = arith.constant 0 : i32
    %c0_i32_0 = arith.constant 0 : i32
    %c0_i32_1 = arith.constant 0 : i32
    return %c0_i32, %c0_i32_0 : i32, i32
  }
  func.func @transform_4(%arg0: i32) -> (i32, i32) {
    %c0_i32 = arith.constant 0 : i32
    %c0_i32_0 = arith.constant 0 : i32
    %c0_i32_1 = arith.constant 0 : i32
    return %c0_i32, %c0_i32_0 : i32, i32
  }
  func.func @transform_5(%arg0: i32) -> (i32, i32) {
    %c0_i32 = arith.constant 0 : i32
    %c0_i32_0 = arith.constant 0 : i32
    %c0_i32_1 = arith.constant 0 : i32
    return %c0_i32, %c0_i32_0 : i32, i32
  }
  func.func @transform_6(%arg0: i32) -> (i32, i32) {
    %c0_i32 = arith.constant 0 : i32
    %c0_i32_0 = arith.constant 0 : i32
    return %c0_i32, %arg0 : i32, i32
  }
}

module attributes {stable_mosaic.version = 11 : i64} {
  func.func @_attention_kernel(%arg0: i32, %arg1: memref<128x128xf32, #tpu.memory_space<vmem>>, %arg2: memref<128x128xbf16, #tpu.memory_space<vmem>>, %arg3: memref<1x128xf32, #tpu.memory_space<vmem>>, %arg4: memref<128x256xbf16, #tpu.memory_space<vmem>>, %arg5: memref<1x256xf32, #tpu.memory_space<vmem>>, %arg6: memref<128x128xf32, #tpu.memory_space<vmem>>, %arg7: memref<128x128xf32, #tpu.memory_space<vmem>>, %arg8: memref<128x128xbf16, #tpu.memory_space<vmem>>) attributes {dimension_semantics = [#tpu.dimension_semantics<arbitrary>], iteration_bounds = array<i64: 1>, scalar_prefetch = 0 : i64, scratch_operands = 1 : i64, tpu.core_type = #tpu.core_type<tc>, window_params = [{pipeline_mode = #tpu.pipeline_mode<synchronous>, transform_indices = @transform_0, window_bounds = array<i64: 128, 128>}, {pipeline_mode = #tpu.pipeline_mode<synchronous>, transform_indices = @transform_1, window_bounds = array<i64: 128, 128>}, {pipeline_mode = #tpu.pipeline_mode<synchronous>, transform_indices = @transform_2, window_bounds = array<i64: 1, 128>}, {pipeline_mode = #tpu.pipeline_mode<synchronous>, transform_indices = @transform_3, window_bounds = array<i64: 128, 256>}, {pipeline_mode = #tpu.pipeline_mode<synchronous>, transform_indices = @transform_4, window_bounds = array<i64: 1, 256>}, {pipeline_mode = #tpu.pipeline_mode<synchronous>, transform_indices = @transform_5, window_bounds = array<i64: 128, 128>}, {transform_indices = @transform_6, window_bounds = array<i64: 128, 128>}]} {
    %c0_i32 = arith.constant 0 : i32
    %0 = arith.cmpi eq, %arg0, %c0_i32 : i32
    %1 = arith.extui %0 : i1 to i32
    %c0_i32_0 = arith.constant 0 : i32
    %2 = arith.cmpi ne, %1, %c0_i32_0 : i32
    scf.if %2 {
      %c0_22 = arith.constant 0 : index
      %c0_23 = arith.constant 0 : index
      %50 = vector.load %arg1[%c0_22, %c0_23] : memref<128x128xf32, #tpu.memory_space<vmem>>, vector<128x128xf32>
      %51 = arith.truncf %50 : vector<128x128xf32> to vector<128x128xbf16>
      %c0_24 = arith.constant 0 : index
      %c0_25 = arith.constant 0 : index
      %52 = vector.load %arg2[%c0_24, %c0_25] : memref<128x128xbf16, #tpu.memory_space<vmem>>, vector<128x128xbf16>
      %cst_26 = arith.constant dense<0.000000e+00> : vector<128x128xf32>
      %53 = tpu.matmul %51, %52, %cst_26 {dimension_numbers = #tpu.dot_dimension_numbers<[1], [0], [0], [1], [0, 0, 1, 1], [], []>} : vector<128x128xbf16>, vector<128x128xbf16>, vector<128x128xf32> -> vector<128x128xf32>
      %c0_27 = arith.constant 0 : index
      %c0_28 = arith.constant 0 : index
      %54 = vector.load %arg3[%c0_27, %c0_28] : memref<1x128xf32, #tpu.memory_space<vmem>>, vector<1x128xf32>
      %55 = vector.broadcast %54 : vector<1x128xf32> to vector<128x128xf32>
      %56 = arith.addf %53, %55 : vector<128x128xf32>
      %57 = arith.truncf %56 : vector<128x128xf32> to vector<128x128xbf16>
      %c0_29 = arith.constant 0 : index
      %c0_30 = arith.constant 0 : index
      %58 = vector.load %arg8[%c0_29, %c0_30] : memref<128x128xbf16, #tpu.memory_space<vmem>>, vector<128x128xbf16>
      tpu.vector_store %arg8[%c0_29, %c0_30], %57 {strides = array<i32>} : memref<128x128xbf16, #tpu.memory_space<vmem>>, vector<128x128xbf16>,
      %cst_31 = arith.constant 0.000000e+00 : f32
      %59 = vector.broadcast %cst_31 : f32 to vector<128x128xf32>
      %c0_32 = arith.constant 0 : index
      %c0_33 = arith.constant 0 : index
      %60 = vector.load %arg6[%c0_32, %c0_33] : memref<128x128xf32, #tpu.memory_space<vmem>>, vector<128x128xf32>
      tpu.vector_store %arg6[%c0_32, %c0_33], %59 {strides = array<i32>} : memref<128x128xf32, #tpu.memory_space<vmem>>, vector<128x128xf32>,
    } else {
    }
    %c128_i32 = arith.constant 128 : i32
    %3 = arith.muli %arg0, %c128_i32 : i32
    %4 = tpu.assume_multiple %3, 128 : i32
    %5 = arith.index_cast %4 : i32 to index
    %c0 = arith.constant 0 : index
    %6 = vector.load %arg1[%5, %c0] : memref<128x128xf32, #tpu.memory_space<vmem>>, vector<128x128xf32>
    %7 = arith.truncf %6 : vector<128x128xf32> to vector<128x128xbf16>
    %c0_1 = arith.constant 0 : index
    %c0_2 = arith.constant 0 : index
    %8 = vector.load %arg4[%c0_1, %c0_2] : memref<128x256xbf16, #tpu.memory_space<vmem>>, vector<128x256xbf16>
    %cst = arith.constant dense<0.000000e+00> : vector<128x256xf32>
    %9 = tpu.matmul %7, %8, %cst {dimension_numbers = #tpu.dot_dimension_numbers<[1], [0], [0], [1], [0, 0, 1, 1], [], []>} : vector<128x128xbf16>, vector<128x256xbf16>, vector<128x256xf32> -> vector<128x256xf32>
    %c0_3 = arith.constant 0 : index
    %c0_4 = arith.constant 0 : index
    %10 = vector.load %arg5[%c0_3, %c0_4] : memref<1x256xf32, #tpu.memory_space<vmem>>, vector<1x256xf32>
    %11 = vector.broadcast %10 : vector<1x256xf32> to vector<128x256xf32>
    %12 = arith.addf %9, %11 : vector<128x256xf32>
    %13 = vector.extract_strided_slice %12 {offsets = [0, 0], sizes = [128, 128], strides = [1, 1]} : vector<128x256xf32> to vector<128x128xf32>
    %14 = vector.extract_strided_slice %12 {offsets = [0, 128], sizes = [128, 128], strides = [1, 1]} : vector<128x256xf32> to vector<128x128xf32>
    %c0_5 = arith.constant 0 : index
    %c0_6 = arith.constant 0 : index
    %15 = vector.load %arg8[%c0_5, %c0_6] : memref<128x128xbf16, #tpu.memory_space<vmem>>, vector<128x128xbf16>
    %16 = arith.truncf %13 : vector<128x128xf32> to vector<128x128xbf16>
    %cst_7 = arith.constant dense<0.000000e+00> : vector<128x128xf32>
    %17 = tpu.matmul %15, %16, %cst_7 {dimension_numbers = #tpu.dot_dimension_numbers<[1], [1], [0], [0], [0, 0, 1, 0], [], []>} : vector<128x128xbf16>, vector<128x128xbf16>, vector<128x128xf32> -> vector<128x128xf32>
    %cst_8 = arith.constant 0.176776692 : f32
    %18 = vector.broadcast %cst_8 : f32 to vector<128x128xf32>
    %19 = arith.mulf %17, %18 : vector<128x128xf32>
    %20 = tpu.iota {dimensions = array<i32: 0>} : vector<128x128xi32>
    %c8_i32 = arith.constant 8 : i32
    %21 = vector.broadcast %c8_i32 : i32 to vector<128x128xi32>
    %22 = arith.cmpi slt, %20, %21 : vector<128x128xi32>
    %cst_9 = arith.constant -1.000000e+30 : f32
    %23 = vector.broadcast %cst_9 : f32 to vector<128x128xf32>
    %24 = arith.select %22, %19, %23 : vector<128x128xi1>, vector<128x128xf32>
    %cst_10 = arith.constant dense<0xFF800000> : vector<128xf32>
    %25 = vector.multi_reduction <maximumf>, %24, %cst_10 [0] : vector<128x128xf32> to vector<128xf32>
    %26 = vector.shape_cast %25 : vector<128xf32> to vector<1x128xf32>
    %27 = vector.broadcast %26 : vector<1x128xf32> to vector<128x128xf32>
    %28 = arith.subf %24, %27 : vector<128x128xf32>
    %29 = math.exp %28 : vector<128x128xf32>
    %cst_11 = arith.constant dense<0.000000e+00> : vector<128xf32>
    %30 = vector.multi_reduction <add>, %29, %cst_11 [0] : vector<128x128xf32> to vector<128xf32>
    %31 = vector.shape_cast %30 : vector<128xf32> to vector<1x128xf32>
    %32 = tpu.reciprocal %31 : vector<1x128xf32> -> vector<1x128xf32>
    %33 = vector.broadcast %32 : vector<1x128xf32> to vector<128x128xf32>
    %34 = arith.mulf %29, %33 : vector<128x128xf32>
    %35 = tpu.iota {dimensions = array<i32: 1>} : vector<128x128xi32>
    %c128_i32_12 = arith.constant 128 : i32
    %36 = arith.muli %arg0, %c128_i32_12 : i32
    %37 = vector.broadcast %36 : i32 to vector<128x128xi32>
    %38 = arith.addi %35, %37 : vector<128x128xi32>
    %c8_i32_13 = arith.constant 8 : i32
    %39 = vector.broadcast %c8_i32_13 : i32 to vector<128x128xi32>
    %40 = arith.cmpi slt, %38, %39 : vector<128x128xi32>
    %cst_14 = arith.constant 0.000000e+00 : f32
    %41 = vector.broadcast %cst_14 : f32 to vector<128x128xf32>
    %42 = arith.select %40, %34, %41 : vector<128x128xi1>, vector<128x128xf32>
    %c0_15 = arith.constant 0 : index
    %c0_16 = arith.constant 0 : index
    %43 = vector.load %arg7[%c0_15, %c0_16] : memref<128x128xf32, #tpu.memory_space<vmem>>, vector<128x128xf32>
    tpu.vector_store %arg7[%c0_15, %c0_16], %42 {strides = array<i32>} : memref<128x128xf32, #tpu.memory_space<vmem>>, vector<128x128xf32>,
    %c0_17 = arith.constant 0 : index
    %c0_18 = arith.constant 0 : index
    %44 = vector.load %arg6[%c0_17, %c0_18] : memref<128x128xf32, #tpu.memory_space<vmem>>, vector<128x128xf32>
    %45 = arith.truncf %42 : vector<128x128xf32> to vector<128x128xbf16>
    %46 = arith.truncf %14 : vector<128x128xf32> to vector<128x128xbf16>
    %cst_19 = arith.constant dense<0.000000e+00> : vector<128x128xf32>
    %47 = tpu.matmul %45, %46, %cst_19 {dimension_numbers = #tpu.dot_dimension_numbers<[1], [0], [0], [1], [0, 0, 1, 1], [], []>} : vector<128x128xbf16>, vector<128x128xbf16>, vector<128x128xf32> -> vector<128x128xf32>
    %48 = arith.addf %44, %47 : vector<128x128xf32>
    %c0_20 = arith.constant 0 : index
    %c0_21 = arith.constant 0 : index
    %49 = vector.load %arg6[%c0_20, %c0_21] : memref<128x128xf32, #tpu.memory_space<vmem>>, vector<128x128xf32>
    tpu.vector_store %arg6[%c0_20, %c0_21], %48 {strides = array<i32>} : memref<128x128xf32, #tpu.memory_space<vmem>>, vector<128x128xf32>,
    return
  }
  func.func @transform_0(%arg0: i32) -> (i32, i32) {
    %c0_i32 = arith.constant 0 : i32
    %c0_i32_0 = arith.constant 0 : i32
    %c0_i32_1 = arith.constant 0 : i32
    return %c0_i32, %c0_i32_0 : i32, i32
  }
  func.func @transform_1(%arg0: i32) -> (i32, i32) {
    %c0_i32 = arith.constant 0 : i32
    %c0_i32_0 = arith.constant 0 : i32
    %c0_i32_1 = arith.constant 0 : i32
    return %c0_i32, %c0_i32_0 : i32, i32
  }
  func.func @transform_2(%arg0: i32) -> (i32, i32) {
    %c0_i32 = arith.constant 0 : i32
    %c0_i32_0 = arith.constant 0 : i32
    %c0_i32_1 = arith.constant 0 : i32
    return %c0_i32, %c0_i32_0 : i32, i32
  }
  func.func @transform_3(%arg0: i32) -> (i32, i32) {
    %c0_i32 = arith.constant 0 : i32
    %c0_i32_0 = arith.constant 0 : i32
    %c0_i32_1 = arith.constant 0 : i32
    return %c0_i32, %c0_i32_0 : i32, i32
  }
  func.func @transform_4(%arg0: i32) -> (i32, i32) {
    %c0_i32 = arith.constant 0 : i32
    %c0_i32_0 = arith.constant 0 : i32
    %c0_i32_1 = arith.constant 0 : i32
    return %c0_i32, %c0_i32_0 : i32, i32
  }
  func.func @transform_5(%arg0: i32) -> (i32, i32) {
    %c0_i32 = arith.constant 0 : i32
    %c0_i32_0 = arith.constant 0 : i32
    %c0_i32_1 = arith.constant 0 : i32
    return %c0_i32, %c0_i32_0 : i32, i32
  }
  func.func @transform_6(%arg0: i32) -> (i32, i32) {
    %c0_i32 = arith.constant 0 : i32
    %c0_i32_0 = arith.constant 0 : i32
    return %c0_i32, %arg0 : i32, i32
  }
}

</mosaic_0001>

<llo_original>
// kernel: tpu_custom_call.1
$region0: #{tpu_custom_call.1}
  #allocation0 [shape = 'u32[]', space=smem, size = 0x4, offset = 0x4, fixed_abs, tag = 'smem constant byte address 0x4 - core index']
  #allocation1 [shape = 'u32[72,128]{1,0:T(1,128)}', space=vmem, size = 0x9000, scoped, tag = 'internal scratch']
  #allocation2 [shape = 'bf16[128,128]{1,0:T(8,128)(2,1)}', space=vmem, size = 0x8000, scoped, tag = 'scratch operand']
  %s0 = inlined_call_operand.hbm [shape: f32[128,128], index: 0, kind: input, shape index: {}]
  %s1 = inlined_call_operand.hbm [shape: bf16[128,128], index: 1, kind: input, shape index: {}]
  %s2 = inlined_call_operand.vmem [shape: f32[1,128], index: 2, kind: input, shape index: {}]
  %s3 = inlined_call_operand.hbm [shape: bf16[128,256], index: 3, kind: input, shape index: {}]
  %s4 = inlined_call_operand.vmem [shape: f32[1,256], index: 4, kind: input, shape index: {}]
  %s5 = inlined_call_operand.hbm [shape: f32[128,128], index: 5, kind: output, shape index: {0}]
  %s6 = inlined_call_operand.hbm [shape: f32[128,128], index: 6, kind: output, shape index: {1}]
  %7 = xla_tuple %s5, %s6
  %s8 = sld [smem:[#allocation0]]
  $region54: #{tpu_custom_call.1} parent=0
    _
  %s10 = ssub.s32 1, %s8
  %s11 = scalar_select 0, %s10, %s8
  $region1: #{tpu_custom_call.1} parent=0
    #allocation3 [shape = 'u8[65536]{0}', space=vmem, size = 0x10000, scoped, tag = 'input window, operand 0, single buffered']
    #allocation4 [shape = 's32[1]{0}', space=sflag, size = 0x4, scoped, tag = 'scoped memory for tpu_custom_call.1']
    #allocation5 [shape = 's32[1]{0}', space=sflag, size = 0x4, scoped, tag = 'scoped memory for tpu_custom_call.1']
    #allocation6 [shape = 'u8[32768]{0}', space=vmem, size = 0x8000, scoped, tag = 'input window, operand 1, single buffered']
    #allocation7 [shape = 's32[1]{0}', space=sflag, size = 0x4, scoped, tag = 'scoped memory for tpu_custom_call.1']
    #allocation8 [shape = 'u8[65536]{0}', space=vmem, size = 0x10000, scoped, tag = 'input window, operand 3, single buffered']
    #allocation9 [shape = 'u8[65536]{0}', space=vmem, size = 0x10000, scoped, tag = 'output window, operand 0, single buffered']
    #allocation10 [shape = 'u8[65536]{0}', space=vmem, size = 0x10000, scoped, tag = 'output window, operand 1, single buffered']
    #allocation11 [shape = 's32[1]{0}', space=sflag, size = 0x4, scoped, tag = 'scoped memory for tpu_custom_call.1']
    %12 = vsyncpa [#allocation4], 0
    %13 = vsyncpa [#allocation7], 0
    %14 = vsyncpa [#allocation5], 0
    %15 = vsyncpa [#allocation11], 0
    // Predicated region
    $region2: #{tpu_custom_call.1} parent=1 // pred_check
      _
    $region3: #{tpu_custom_call.1} parent=1 // pred_check_branch
      %17 = sbr.rel (0) target = $region5
    $region4: #{tpu_custom_call.1} parent=1 // pred_region
      %19 = vsyncadd [#allocation4], 0
      %s20 = sshll.u32 %s0, 4
      %s21 = int_to_ptr.hbm [resolvable:$true] %s20
      %s22 = sshll.u32 [#allocation3], 4
      %s23 = int_to_ptr.vmem [resolvable:$true] %s22
      %28 = dma.hbm_to_vmem [thread:$0]  %s21, 2048, %s23, [#allocation4], 128, 128, 8
    $region5: #{tpu_custom_call.1} parent=1 // pred_fallthru
      _
    // Predicated region
    $region6: #{tpu_custom_call.1} parent=1 // pred_check
      _
    $region7: #{tpu_custom_call.1} parent=1 // pred_check_branch
      %30 = sbr.rel (0) target = $region9
    $region8: #{tpu_custom_call.1} parent=1 // pred_region
      %32 = vsyncadd [#allocation7], 0
      %s33 = sshll.u32 %s1, 4
      %s34 = int_to_ptr.hbm [resolvable:$true] %s33
      %s35 = sshll.u32 [#allocation6], 4
      %s36 = int_to_ptr.vmem [resolvable:$true] %s35
      %41 = dma.hbm_to_vmem [thread:$0]  %s34, 1024, %s36, [#allocation7], 64, 64, 4
    $region9: #{tpu_custom_call.1} parent=1 // pred_fallthru
      _
    // Predicated region
    $region10: #{tpu_custom_call.1} parent=1 // pred_check
      _
    $region11: #{tpu_custom_call.1} parent=1 // pred_check_branch
      %43 = sbr.rel (0) target = $region13
    $region12: #{tpu_custom_call.1} parent=1 // pred_region
      _
    $region13: #{tpu_custom_call.1} parent=1 // pred_fallthru
      _
    // Predicated region
    $region14: #{tpu_custom_call.1} parent=1 // pred_check
      _
    $region15: #{tpu_custom_call.1} parent=1 // pred_check_branch
      %45 = sbr.rel (0) target = $region17
    $region16: #{tpu_custom_call.1} parent=1 // pred_region
      %47 = vsyncadd [#allocation7], 0
      %s48 = sshll.u32 %s3, 4
      %s49 = int_to_ptr.hbm [resolvable:$true] %s48
      %s50 = sshll.u32 [#allocation8], 4
      %s51 = int_to_ptr.vmem [resolvable:$true] %s50
      %56 = dma.hbm_to_vmem [thread:$0]  %s49, 2048, %s51, [#allocation7], 128, 128, 8
    $region17: #{tpu_custom_call.1} parent=1 // pred_fallthru
      _
    // Predicated region
    $region18: #{tpu_custom_call.1} parent=1 // pred_check
      _
    $region19: #{tpu_custom_call.1} parent=1 // pred_check_branch
      %58 = sbr.rel (0) target = $region21
    $region20: #{tpu_custom_call.1} parent=1 // pred_region
      _
    $region21: #{tpu_custom_call.1} parent=1 // pred_fallthru
      _
    // Predicated region
    $region22: #{tpu_custom_call.1} parent=1 // pred_check
      _
    $region23: #{tpu_custom_call.1} parent=1 // pred_check_branch
      %60 = sbr.rel (0) target = $region25
    $region24: #{tpu_custom_call.1} parent=1 // pred_region
      %62 = dma.done [#allocation4], 2048
    $region25: #{tpu_custom_call.1} parent=1 // pred_fallthru
      _
    // Predicated region
    $region26: #{tpu_custom_call.1} parent=1 // pred_check
      _
    $region27: #{tpu_custom_call.1} parent=1 // pred_check_branch
      %64 = sbr.rel (0) target = $region29
    $region28: #{tpu_custom_call.1} parent=1 // pred_region
      %66 = dma.done [#allocation7], 1024
    $region29: #{tpu_custom_call.1} parent=1 // pred_fallthru
      _
    // Predicated region
    $region30: #{tpu_custom_call.1} parent=1 // pred_check
      _
    $region31: #{tpu_custom_call.1} parent=1 // pred_check_branch
      %68 = sbr.rel (0) target = $region33
    $region32: #{tpu_custom_call.1} parent=1 // pred_region
      %70 = dma.done [#allocation7], 2048
    $region33: #{tpu_custom_call.1} parent=1 // pred_fallthru
      _
    %p71 = scmp.eq.s32.totalorder 0, 0
    // Predicated region
    $region34: #{tpu_custom_call.1} parent=1 // pred_check
      %p72 = pneg %p71
    $region35: #{tpu_custom_call.1} parent=1 // pred_check_branch
      %74 = sbr.rel (%p72) target = $region37
    $region36: #{tpu_custom_call.1} parent=1 // pred_region
      %v75 = vld [vmem:[#allocation3] sm:$0xff]
      %v76 = vld [vmem:[#allocation3 + $0x8] sm:$0xff]
      %v77 = vld [vmem:[#allocation3 + $0x10] sm:$0xff]
      %v78 = vld [vmem:[#allocation3 + $0x18] sm:$0xff]
      %v79 = vld [vmem:[#allocation3 + $0x20] sm:$0xff]
      %v80 = vld [vmem:[#allocation3 + $0x28] sm:$0xff]
      %v81 = vld [vmem:[#allocation3 + $0x30] sm:$0xff]
      %v82 = vld [vmem:[#allocation3 + $0x38] sm:$0xff]
      %v83 = vld [vmem:[#allocation3 + $0x40] sm:$0xff]
      %v84 = vld [vmem:[#allocation3 + $0x48] sm:$0xff]
      %v85 = vld [vmem:[#allocation3 + $0x50] sm:$0xff]
      %v86 = vld [vmem:[#allocation3 + $0x58] sm:$0xff]
      %v87 = vld [vmem:[#allocation3 + $0x60] sm:$0xff]
      %v88 = vld [vmem:[#allocation3 + $0x68] sm:$0xff]
      %v89 = vld [vmem:[#allocation3 + $0x70] sm:$0xff]
      %v90 = vld [vmem:[#allocation3 + $0x78] sm:$0xff]
      %v91 = vpack.c.bf16 %v76, %v75
      %v92 = vpack.c.bf16 %v78, %v77
      %v93 = vpack.c.bf16 %v80, %v79
      %v94 = vpack.c.bf16 %v82, %v81
      %v95 = vpack.c.bf16 %v84, %v83
      %v96 = vpack.c.bf16 %v86, %v85
      %v97 = vpack.c.bf16 %v88, %v87
      %v98 = vpack.c.bf16 %v90, %v89
      %v99 = vld [vmem:[#allocation6] sm:$0xf]
      %v100 = vld [vmem:[#allocation6 + $0x4] sm:$0xf]
      %v101 = vld [vmem:[#allocation6 + $0x8] sm:$0xf]
      %v102 = vld [vmem:[#allocation6 + $0xc] sm:$0xf]
      %v103 = vld [vmem:[#allocation6 + $0x10] sm:$0xf]
      %v104 = vld [vmem:[#allocation6 + $0x14] sm:$0xf]
      %v105 = vld [vmem:[#allocation6 + $0x18] sm:$0xf]
      %v106 = vld [vmem:[#allocation6 + $0x1c] sm:$0xf]
      %v107 = vld [vmem:[#allocation6 + $0x20] sm:$0xf]
      %v108 = vld [vmem:[#allocation6 + $0x24] sm:$0xf]
      %v109 = vld [vmem:[#allocation6 + $0x28] sm:$0xf]
      %v110 = vld [vmem:[#allocation6 + $0x2c] sm:$0xf]
      %v111 = vld [vmem:[#allocation6 + $0x30] sm:$0xf]
      %v112 = vld [vmem:[#allocation6 + $0x34] sm:$0xf]
      %v113 = vld [vmem:[#allocation6 + $0x38] sm:$0xf]
      %v114 = vld [vmem:[#allocation6 + $0x3c] sm:$0xf]
      %v115 = vld [vmem:[%s2] sm:$0x1]
      %v117 = vperm.slane %v115, 0
      %v135 = vunpack.c.l.b16 %v99
      %v136 = vunpack.c.l.b16 %v100
      %v137 = vunpack.c.l.b16 %v101
      %v138 = vunpack.c.l.b16 %v102
      %v139 = vunpack.c.l.b16 %v103
      %v140 = vunpack.c.l.b16 %v104
      %v141 = vunpack.c.l.b16 %v105
      %v142 = vunpack.c.l.b16 %v106
      %v143 = vunpack.c.l.b16 %v107
      %v144 = vunpack.c.l.b16 %v108
      %v145 = vunpack.c.l.b16 %v109
      %v146 = vunpack.c.l.b16 %v110
      %v147 = vunpack.c.l.b16 %v111
      %v148 = vunpack.c.l.b16 %v112
      %v149 = vunpack.c.l.b16 %v113
      %v150 = vunpack.c.l.b16 %v114
      %v151 = vpack.c.b16 %v136, %v135
      %v152 = vpack.c.b16 %v138, %v137
      %v153 = vpack.c.b16 %v140, %v139
      %v154 = vpack.c.b16 %v142, %v141
      %v155 = vpack.c.b16 %v144, %v143
      %v156 = vpack.c.b16 %v146, %v145
      %v157 = vpack.c.b16 %v148, %v147
      %v158 = vpack.c.b16 %v150, %v149
      %167 = vmatpush.bf16.msra.mxu0 %v158
      %168 = vmatpush.bf16.msra.mxu0 %v157
      %169 = vmatpush.bf16.msra.mxu0 %v156
      %170 = vmatpush.bf16.msra.mxu0 %v155
      %171 = vmatpush.bf16.msra.mxu0 %v154
      %172 = vmatpush.bf16.msra.mxu0 %v153
      %173 = vmatpush.bf16.msra.mxu0 %v152
      %174 = vmatpush.bf16.msra.mxu0 %v151
      %175 = vmatmul.bf16.gmra.mxu0 %v91
      %v176 = vpop.f32.mrf.mxu0
      %v177 = vadd.f32 %v117, %v176
      %v178 = vpop.f32.mrf.mxu0
      %v179 = vadd.f32 %v117, %v178
      %180 = vmatmul.bf16.gmra.mxu0 %v92
      %v181 = vpop.f32.mrf.mxu0
      %v182 = vadd.f32 %v117, %v181
      %v183 = vpop.f32.mrf.mxu0
      %v184 = vadd.f32 %v117, %v183
      %185 = vmatmul.bf16.gmra.mxu0 %v93
      %v186 = vpop.f32.mrf.mxu0
      %v187 = vadd.f32 %v117, %v186
      %v188 = vpop.f32.mrf.mxu0
      %v189 = vadd.f32 %v117, %v188
      %190 = vmatmul.bf16.gmra.mxu0 %v94
      %v191 = vpop.f32.mrf.mxu0
      %v192 = vadd.f32 %v117, %v191
      %v193 = vpop.f32.mrf.mxu0
      %v194 = vadd.f32 %v117, %v193
      %195 = vmatmul.bf16.gmra.mxu0 %v95
      %v196 = vpop.f32.mrf.mxu0
      %v197 = vadd.f32 %v117, %v196
      %v198 = vpop.f32.mrf.mxu0
      %v199 = vadd.f32 %v117, %v198
      %200 = vmatmul.bf16.gmra.mxu0 %v96
      %v201 = vpop.f32.mrf.mxu0
      %v202 = vadd.f32 %v117, %v201
      %v203 = vpop.f32.mrf.mxu0
      %v204 = vadd.f32 %v117, %v203
      %205 = vmatmul.bf16.gmra.mxu0 %v97
      %v206 = vpop.f32.mrf.mxu0
      %v207 = vadd.f32 %v117, %v206
      %v208 = vpop.f32.mrf.mxu0
      %v209 = vadd.f32 %v117, %v208
      %210 = vmatmul.bf16.gmra.mxu0 %v98
      %v211 = vpop.f32.mrf.mxu0
      %v212 = vadd.f32 %v117, %v211
      %v213 = vpop.f32.mrf.mxu0
      %v214 = vadd.f32 %v117, %v213
      %215 = vdwg.mxu0
      %v216 = vpack.c.bf16 %v177, %v177
      %v217 = vpack.c.bf16 %v179, %v179
      %v218 = vpack.c.bf16 %v182, %v182
      %v219 = vpack.c.bf16 %v184, %v184
      %v220 = vpack.c.bf16 %v187, %v187
      %v221 = vpack.c.bf16 %v189, %v189
      %v222 = vpack.c.bf16 %v192, %v192
      %v223 = vpack.c.bf16 %v194, %v194
      %v224 = vpack.c.bf16 %v197, %v197
      %v225 = vpack.c.bf16 %v199, %v199
      %v226 = vpack.c.bf16 %v202, %v202
      %v227 = vpack.c.bf16 %v204, %v204
      %v228 = vpack.c.bf16 %v207, %v207
      %v229 = vpack.c.bf16 %v209, %v209
      %v230 = vpack.c.bf16 %v212, %v212
      %v231 = vpack.c.bf16 %v214, %v214
      %232 = vst [vmem:[#allocation2] sm:$0xf] %v216
      %233 = vst [vmem:[#allocation2 + $0x4] sm:$0xf] %v217
      %234 = vst [vmem:[#allocation2 + $0x8] sm:$0xf] %v218
      %235 = vst [vmem:[#allocation2 + $0xc] sm:$0xf] %v219
      %236 = vst [vmem:[#allocation2 + $0x10] sm:$0xf] %v220
      %237 = vst [vmem:[#allocation2 + $0x14] sm:$0xf] %v221
      %238 = vst [vmem:[#allocation2 + $0x18] sm:$0xf] %v222
      %239 = vst [vmem:[#allocation2 + $0x1c] sm:$0xf] %v223
      %240 = vst [vmem:[#allocation2 + $0x20] sm:$0xf] %v224
      %241 = vst [vmem:[#allocation2 + $0x24] sm:$0xf] %v225
      %242 = vst [vmem:[#allocation2 + $0x28] sm:$0xf] %v226
      %243 = vst [vmem:[#allocation2 + $0x2c] sm:$0xf] %v227
      %244 = vst [vmem:[#allocation2 + $0x30] sm:$0xf] %v228
      %245 = vst [vmem:[#allocation2 + $0x34] sm:$0xf] %v229
      %246 = vst [vmem:[#allocation2 + $0x38] sm:$0xf] %v230
      %247 = vst [vmem:[#allocation2 + $0x3c] sm:$0xf] %v231
      %248 = vst [vmem:[#allocation9] sm:$0xff] 0.0
      %249 = vst [vmem:[#allocation9 + $0x8] sm:$0xff] 0.0
      %250 = vst [vmem:[#allocation9 + $0x10] sm:$0xff] 0.0
      %251 = vst [vmem:[#allocation9 + $0x18] sm:$0xff] 0.0
      %252 = vst [vmem:[#allocation9 + $0x20] sm:$0xff] 0.0
      %253 = vst [vmem:[#allocation9 + $0x28] sm:$0xff] 0.0
      %254 = vst [vmem:[#allocation9 + $0x30] sm:$0xff] 0.0
      %255 = vst [vmem:[#allocation9 + $0x38] sm:$0xff] 0.0
      %256 = vst [vmem:[#allocation9 + $0x40] sm:$0xff] 0.0
      %257 = vst [vmem:[#allocation9 + $0x48] sm:$0xff] 0.0
      %258 = vst [vmem:[#allocation9 + $0x50] sm:$0xff] 0.0
      %259 = vst [vmem:[#allocation9 + $0x58] sm:$0xff] 0.0
      %260 = vst [vmem:[#allocation9 + $0x60] sm:$0xff] 0.0
      %261 = vst [vmem:[#allocation9 + $0x68] sm:$0xff] 0.0
      %262 = vst [vmem:[#allocation9 + $0x70] sm:$0xff] 0.0
      %263 = vst [vmem:[#allocation9 + $0x78] sm:$0xff] 0.0
    $region37: #{tpu_custom_call.1} parent=1 // pred_fallthru
      _
    %s264 = smul.u32 0, 128
    %s265 = scalar_lea.vmem [#allocation3], %s264
    %v266 = vld [vmem:[%s265] sm:$0xff]
    %v267 = vld [vmem:[%s265 + $0x8] sm:$0xff]
    %v268 = vld [vmem:[%s265 + $0x10] sm:$0xff]
    %v269 = vld [vmem:[%s265 + $0x18] sm:$0xff]
    %v270 = vld [vmem:[%s265 + $0x20] sm:$0xff]
    %v271 = vld [vmem:[%s265 + $0x28] sm:$0xff]
    %v272 = vld [vmem:[%s265 + $0x30] sm:$0xff]
    %v273 = vld [vmem:[%s265 + $0x38] sm:$0xff]
    %v274 = vld [vmem:[%s265 + $0x40] sm:$0xff]
    %v275 = vld [vmem:[%s265 + $0x48] sm:$0xff]
    %v276 = vld [vmem:[%s265 + $0x50] sm:$0xff]
    %v277 = vld [vmem:[%s265 + $0x58] sm:$0xff]
    %v278 = vld [vmem:[%s265 + $0x60] sm:$0xff]
    %v279 = vld [vmem:[%s265 + $0x68] sm:$0xff]
    %v280 = vld [vmem:[%s265 + $0x70] sm:$0xff]
    %v281 = vld [vmem:[%s265 + $0x78] sm:$0xff]
    %v282 = vpack.c.bf16 %v267, %v266
    %v283 = vpack.c.bf16 %v269, %v268
    %v284 = vpack.c.bf16 %v271, %v270
    %v285 = vpack.c.bf16 %v273, %v272
    %v286 = vpack.c.bf16 %v275, %v274
    %v287 = vpack.c.bf16 %v277, %v276
    %v288 = vpack.c.bf16 %v279, %v278
    %v289 = vpack.c.bf16 %v281, %v280
    %v290 = vld [vmem:[#allocation8] sm:$0xff]
    %v291 = vld [vmem:[#allocation8 + $0x8] sm:$0xff]
    %v292 = vld [vmem:[#allocation8 + $0x10] sm:$0xff]
    %v293 = vld [vmem:[#allocation8 + $0x18] sm:$0xff]
    %v294 = vld [vmem:[#allocation8 + $0x20] sm:$0xff]
    %v295 = vld [vmem:[#allocation8 + $0x28] sm:$0xff]
    %v296 = vld [vmem:[#allocation8 + $0x30] sm:$0xff]
    %v297 = vld [vmem:[#allocation8 + $0x38] sm:$0xff]
    %v298 = vld [vmem:[#allocation8 + $0x40] sm:$0xff]
    %v299 = vld [vmem:[#allocation8 + $0x48] sm:$0xff]
    %v300 = vld [vmem:[#allocation8 + $0x50] sm:$0xff]
    %v301 = vld [vmem:[#allocation8 + $0x58] sm:$0xff]
    %v302 = vld [vmem:[#allocation8 + $0x60] sm:$0xff]
    %v303 = vld [vmem:[#allocation8 + $0x68] sm:$0xff]
    %v304 = vld [vmem:[#allocation8 + $0x70] sm:$0xff]
    %v305 = vld [vmem:[#allocation8 + $0x78] sm:$0xff]
    %v306 = vld [vmem:[%s4] sm:$0x3]
    %v308 = vperm.slane %v306, 0
    %v309 = vperm.slane %v306, 1
    %v328 = vunpack.c.l.b16 %v290
    %v329 = vunpack.c.h.b16 %v290
    %v330 = vunpack.c.l.b16 %v291
    %v331 = vunpack.c.h.b16 %v291
    %v332 = vunpack.c.l.b16 %v292
    %v333 = vunpack.c.h.b16 %v292
    %v334 = vunpack.c.l.b16 %v293
    %v335 = vunpack.c.h.b16 %v293
    %v336 = vunpack.c.l.b16 %v294
    %v337 = vunpack.c.h.b16 %v294
    %v338 = vunpack.c.l.b16 %v295
    %v339 = vunpack.c.h.b16 %v295
    %v340 = vunpack.c.l.b16 %v296
    %v341 = vunpack.c.h.b16 %v296
    %v342 = vunpack.c.l.b16 %v297
    %v343 = vunpack.c.h.b16 %v297
    %v344 = vunpack.c.l.b16 %v298
    %v345 = vunpack.c.h.b16 %v298
    %v346 = vunpack.c.l.b16 %v299
    %v347 = vunpack.c.h.b16 %v299
    %v348 = vunpack.c.l.b16 %v300
    %v349 = vunpack.c.h.b16 %v300
    %v350 = vunpack.c.l.b16 %v301
    %v351 = vunpack.c.h.b16 %v301
    %v352 = vunpack.c.l.b16 %v302
    %v353 = vunpack.c.h.b16 %v302
    %v354 = vunpack.c.l.b16 %v303
    %v355 = vunpack.c.h.b16 %v303
    %v356 = vunpack.c.l.b16 %v304
    %v357 = vunpack.c.h.b16 %v304
    %v358 = vunpack.c.l.b16 %v305
    %v359 = vunpack.c.h.b16 %v305
    %v360 = vpack.c.b16 %v330, %v328
    %v361 = vpack.c.b16 %v331, %v329
    %v362 = vpack.c.b16 %v334, %v332
    %v363 = vpack.c.b16 %v335, %v333
    %v364 = vpack.c.b16 %v338, %v336
    %v365 = vpack.c.b16 %v339, %v337
    %v366 = vpack.c.b16 %v342, %v340
    %v367 = vpack.c.b16 %v343, %v341
    %v368 = vpack.c.b16 %v346, %v344
    %v369 = vpack.c.b16 %v347, %v345
    %v370 = vpack.c.b16 %v350, %v348
    %v371 = vpack.c.b16 %v351, %v349
    %v372 = vpack.c.b16 %v354, %v352
    %v373 = vpack.c.b16 %v355, %v353
    %v374 = vpack.c.b16 %v358, %v356
    %v375 = vpack.c.b16 %v359, %v357
    %392 = vmatpush.bf16.msra.mxu0 %v374
    %393 = vmatpush.bf16.msra.mxu0 %v372
    %394 = vmatpush.bf16.msra.mxu0 %v370
    %395 = vmatpush.bf16.msra.mxu0 %v368
    %396 = vmatpush.bf16.msra.mxu0 %v366
    %397 = vmatpush.bf16.msra.mxu0 %v364
    %398 = vmatpush.bf16.msra.mxu0 %v362
    %399 = vmatpush.bf16.msra.mxu0 %v360
    %400 = vmatmul.bf16.gmra.mxu0 %v282
    %v401 = vpop.f32.mrf.mxu0
    %v402 = vadd.f32 %v308, %v401
    %v403 = vpop.f32.mrf.mxu0
    %v404 = vadd.f32 %v308, %v403
    %405 = vmatmul.bf16.gmra.mxu0 %v283
    %v406 = vpop.f32.mrf.mxu0
    %v407 = vadd.f32 %v308, %v406
    %v408 = vpop.f32.mrf.mxu0
    %v409 = vadd.f32 %v308, %v408
    %410 = vmatmul.bf16.gmra.mxu0 %v284
    %v411 = vpop.f32.mrf.mxu0
    %v412 = vadd.f32 %v308, %v411
    %v413 = vpop.f32.mrf.mxu0
    %v414 = vadd.f32 %v308, %v413
    %415 = vmatmul.bf16.gmra.mxu0 %v285
    %v416 = vpop.f32.mrf.mxu0
    %v417 = vadd.f32 %v308, %v416
    %v418 = vpop.f32.mrf.mxu0
    %v419 = vadd.f32 %v308, %v418
    %420 = vmatmul.bf16.gmra.mxu0 %v286
    %v421 = vpop.f32.mrf.mxu0
    %v422 = vadd.f32 %v308, %v421
    %v423 = vpop.f32.mrf.mxu0
    %v424 = vadd.f32 %v308, %v423
    %425 = vmatmul.bf16.gmra.mxu0 %v287
    %v426 = vpop.f32.mrf.mxu0
    %v427 = vadd.f32 %v308, %v426
    %v428 = vpop.f32.mrf.mxu0
    %v429 = vadd.f32 %v308, %v428
    %430 = vmatmul.bf16.gmra.mxu0 %v288
    %v431 = vpop.f32.mrf.mxu0
    %v432 = vadd.f32 %v308, %v431
    %v433 = vpop.f32.mrf.mxu0
    %v434 = vadd.f32 %v308, %v433
    %435 = vmatmul.bf16.gmra.mxu0 %v289
    %v436 = vpop.f32.mrf.mxu0
    %v437 = vadd.f32 %v308, %v436
    %v438 = vpop.f32.mrf.mxu0
    %v439 = vadd.f32 %v308, %v438
    %440 = vdwg.mxu0
    %441 = vmatpush.bf16.msra.mxu0 %v375
    %442 = vmatpush.bf16.msra.mxu0 %v373
    %443 = vmatpush.bf16.msra.mxu0 %v371
    %444 = vmatpush.bf16.msra.mxu0 %v369
    %445 = vmatpush.bf16.msra.mxu0 %v367
    %446 = vmatpush.bf16.msra.mxu0 %v365
    %447 = vmatpush.bf16.msra.mxu0 %v363
    %448 = vmatpush.bf16.msra.mxu0 %v361
    %449 = vmatmul.bf16.gmra.mxu0 %v282
    %v450 = vpop.f32.mrf.mxu0
    %v451 = vadd.f32 %v309, %v450
    %v452 = vpop.f32.mrf.mxu0
    %v453 = vadd.f32 %v309, %v452
    %454 = vmatmul.bf16.gmra.mxu0 %v283
    %v455 = vpop.f32.mrf.mxu0
    %v456 = vadd.f32 %v309, %v455
    %v457 = vpop.f32.mrf.mxu0
    %v458 = vadd.f32 %v309, %v457
    %459 = vmatmul.bf16.gmra.mxu0 %v284
    %v460 = vpop.f32.mrf.mxu0
    %v461 = vadd.f32 %v309, %v460
    %v462 = vpop.f32.mrf.mxu0
    %v463 = vadd.f32 %v309, %v462
    %464 = vmatmul.bf16.gmra.mxu0 %v285
    %v465 = vpop.f32.mrf.mxu0
    %v466 = vadd.f32 %v309, %v465
    %v467 = vpop.f32.mrf.mxu0
    %v468 = vadd.f32 %v309, %v467
    %469 = vmatmul.bf16.gmra.mxu0 %v286
    %v470 = vpop.f32.mrf.mxu0
    %v471 = vadd.f32 %v309, %v470
    %v472 = vpop.f32.mrf.mxu0
    %v473 = vadd.f32 %v309, %v472
    %474 = vmatmul.bf16.gmra.mxu0 %v287
    %v475 = vpop.f32.mrf.mxu0
    %v476 = vadd.f32 %v309, %v475
    %v477 = vpop.f32.mrf.mxu0
    %v478 = vadd.f32 %v309, %v477
    %479 = vmatmul.bf16.gmra.mxu0 %v288
    %v480 = vpop.f32.mrf.mxu0
    %v481 = vadd.f32 %v309, %v480
    %v482 = vpop.f32.mrf.mxu0
    %v483 = vadd.f32 %v309, %v482
    %484 = vmatmul.bf16.gmra.mxu0 %v289
    %v485 = vpop.f32.mrf.mxu0
    %v486 = vadd.f32 %v309, %v485
    %v487 = vpop.f32.mrf.mxu0
    %v488 = vadd.f32 %v309, %v487
    %489 = vdwg.mxu0
    %v490 = vld [vmem:[#allocation2] sm:$0xf]
    %v491 = vld [vmem:[#allocation2 + $0x4] sm:$0xf]
    %v492 = vld [vmem:[#allocation2 + $0x8] sm:$0xf]
    %v493 = vld [vmem:[#allocation2 + $0xc] sm:$0xf]
    %v494 = vld [vmem:[#allocation2 + $0x10] sm:$0xf]
    %v495 = vld [vmem:[#allocation2 + $0x14] sm:$0xf]
    %v496 = vld [vmem:[#allocation2 + $0x18] sm:$0xf]
    %v497 = vld [vmem:[#allocation2 + $0x1c] sm:$0xf]
    %v498 = vld [vmem:[#allocation2 + $0x20] sm:$0xf]
    %v499 = vld [vmem:[#allocation2 + $0x24] sm:$0xf]
    %v500 = vld [vmem:[#allocation2 + $0x28] sm:$0xf]
    %v501 = vld [vmem:[#allocation2 + $0x2c] sm:$0xf]
    %v502 = vld [vmem:[#allocation2 + $0x30] sm:$0xf]
    %v503 = vld [vmem:[#allocation2 + $0x34] sm:$0xf]
    %v504 = vld [vmem:[#allocation2 + $0x38] sm:$0xf]
    %v505 = vld [vmem:[#allocation2 + $0x3c] sm:$0xf]
    %v506 = vpack.c.bf16 %v404, %v402
    %v507 = vpack.c.bf16 %v409, %v407
    %v508 = vpack.c.bf16 %v414, %v412
    %v509 = vpack.c.bf16 %v419, %v417
    %v510 = vpack.c.bf16 %v424, %v422
    %v511 = vpack.c.bf16 %v429, %v427
    %v512 = vpack.c.bf16 %v434, %v432
    %v513 = vpack.c.bf16 %v439, %v437
    %v530 = vunpack.c.l.b16 %v490
    %v531 = vunpack.c.l.b16 %v491
    %v532 = vunpack.c.l.b16 %v492
    %v533 = vunpack.c.l.b16 %v493
    %v534 = vunpack.c.l.b16 %v494
    %v535 = vunpack.c.l.b16 %v495
    %v536 = vunpack.c.l.b16 %v496
    %v537 = vunpack.c.l.b16 %v497
    %v538 = vunpack.c.l.b16 %v498
    %v539 = vunpack.c.l.b16 %v499
    %v540 = vunpack.c.l.b16 %v500
    %v541 = vunpack.c.l.b16 %v501
    %v542 = vunpack.c.l.b16 %v502
    %v543 = vunpack.c.l.b16 %v503
    %v544 = vunpack.c.l.b16 %v504
    %v545 = vunpack.c.l.b16 %v505
    %v546 = vpack.c.b16 %v531, %v530
    %v547 = vpack.c.b16 %v533, %v532
    %v548 = vpack.c.b16 %v535, %v534
    %v549 = vpack.c.b16 %v537, %v536
    %v550 = vpack.c.b16 %v539, %v538
    %v551 = vpack.c.b16 %v541, %v540
    %v552 = vpack.c.b16 %v543, %v542
    %v553 = vpack.c.b16 %v545, %v544
    %562 = vmatpush.bf16.xpose.msra.mxu0 %v513
    %563 = vmatpush.bf16.xpose.msra.mxu0 %v512
    %564 = vmatpush.bf16.xpose.msra.mxu0 %v511
    %565 = vmatpush.bf16.xpose.msra.mxu0 %v510
    %566 = vmatpush.bf16.xpose.msra.mxu0 %v509
    %567 = vmatpush.bf16.xpose.msra.mxu0 %v508
    %568 = vmatpush.bf16.xpose.msra.mxu0 %v507
    %569 = vmatpush.bf16.xpose.msra.mxu0 %v506
    %570 = vmatmul.bf16.gmra.mxu0 %v546
    %v571 = vpop.f32.mrf.mxu0
    %v572 = vadd.f32 0.0, %v571
    %v573 = vpop.f32.mrf.mxu0
    %v574 = vadd.f32 0.0, %v573
    %575 = vmatmul.bf16.gmra.mxu0 %v547
    %v576 = vpop.f32.mrf.mxu0
    %v577 = vadd.f32 0.0, %v576
    %v578 = vpop.f32.mrf.mxu0
    %v579 = vadd.f32 0.0, %v578
    %580 = vmatmul.bf16.gmra.mxu0 %v548
    %v581 = vpop.f32.mrf.mxu0
    %v582 = vadd.f32 0.0, %v581
    %v583 = vpop.f32.mrf.mxu0
    %v584 = vadd.f32 0.0, %v583
    %585 = vmatmul.bf16.gmra.mxu0 %v549
    %v586 = vpop.f32.mrf.mxu0
    %v587 = vadd.f32 0.0, %v586
    %v588 = vpop.f32.mrf.mxu0
    %v589 = vadd.f32 0.0, %v588
    %590 = vmatmul.bf16.gmra.mxu0 %v550
    %v591 = vpop.f32.mrf.mxu0
    %v592 = vadd.f32 0.0, %v591
    %v593 = vpop.f32.mrf.mxu0
    %v594 = vadd.f32 0.0, %v593
    %595 = vmatmul.bf16.gmra.mxu0 %v551
    %v596 = vpop.f32.mrf.mxu0
    %v597 = vadd.f32 0.0, %v596
    %v598 = vpop.f32.mrf.mxu0
    %v599 = vadd.f32 0.0, %v598
    %600 = vmatmul.bf16.gmra.mxu0 %v552
    %v601 = vpop.f32.mrf.mxu0
    %v602 = vadd.f32 0.0, %v601
    %v603 = vpop.f32.mrf.mxu0
    %v604 = vadd.f32 0.0, %v603
    %605 = vmatmul.bf16.gmra.mxu0 %v553
    %v606 = vpop.f32.mrf.mxu0
    %v607 = vadd.f32 0.0, %v606
    %v608 = vpop.f32.mrf.mxu0
    %v609 = vadd.f32 0.0, %v608
    %610 = vdwg.mxu0
    %v611 = vmul.f32 %v572, 0.17677669
    %v612 = vmul.f32 %v574, 0.17677669
    %v613 = vmul.f32 %v577, 0.17677669
    %v614 = vmul.f32 %v579, 0.17677669
    %v615 = vmul.f32 %v582, 0.17677669
    %v616 = vmul.f32 %v584, 0.17677669
    %v617 = vmul.f32 %v587, 0.17677669
    %v618 = vmul.f32 %v589, 0.17677669
    %v619 = vmul.f32 %v592, 0.17677669
    %v620 = vmul.f32 %v594, 0.17677669
    %v621 = vmul.f32 %v597, 0.17677669
    %v622 = vmul.f32 %v599, 0.17677669
    %v623 = vmul.f32 %v602, 0.17677669
    %v624 = vmul.f32 %v604, 0.17677669
    %v625 = vmul.f32 %v607, 0.17677669
    %v626 = vmul.f32 %v609, 0.17677669
    %v627 = vlaneseq
    %v628 = vshrl.u32 %v627, 7
    %v629 = vadd.s32 %v628, 8
    %v630 = vadd.s32 %v628, 16
    %v631 = vadd.s32 %v628, 24
    %v632 = vadd.s32 %v628, 32
    %v633 = vadd.s32 %v628, 40
    %v634 = vadd.s32 %v628, 48
    %v635 = vadd.s32 %v628, 56
    %v636 = vadd.s32 %v628, 64
    %v637 = vadd.s32 %v628, 72
    %v638 = vadd.s32 %v628, 80
    %v639 = vadd.s32 %v628, 88
    %v640 = vadd.s32 %v628, 96
    %v641 = vadd.s32 %v628, 104
    %v642 = vadd.s32 %v628, 112
    %v643 = vadd.s32 %v628, 120
    %vm644 = vcmp.lt.s32.totalorder %v628, 8
    %vm645 = vcmp.lt.s32.totalorder %v629, 8
    %vm646 = vcmp.lt.s32.totalorder %v630, 8
    %vm647 = vcmp.lt.s32.totalorder %v631, 8
    %vm648 = vcmp.lt.s32.totalorder %v632, 8
    %vm649 = vcmp.lt.s32.totalorder %v633, 8
    %vm650 = vcmp.lt.s32.totalorder %v634, 8
    %vm651 = vcmp.lt.s32.totalorder %v635, 8
    %vm652 = vcmp.lt.s32.totalorder %v636, 8
    %vm653 = vcmp.lt.s32.totalorder %v637, 8
    %vm654 = vcmp.lt.s32.totalorder %v638, 8
    %vm655 = vcmp.lt.s32.totalorder %v639, 8
    %vm656 = vcmp.lt.s32.totalorder %v640, 8
    %vm657 = vcmp.lt.s32.totalorder %v641, 8
    %vm658 = vcmp.lt.s32.totalorder %v642, 8
    %vm659 = vcmp.lt.s32.totalorder %v643, 8
    %v660 = vsel %vm644, %v611, -1e+30
    %v661 = vsel %vm645, %v612, -1e+30
    %v662 = vsel %vm646, %v613, -1e+30
    %v663 = vsel %vm647, %v614, -1e+30
    %v664 = vsel %vm648, %v615, -1e+30
    %v665 = vsel %vm649, %v616, -1e+30
    %v666 = vsel %vm650, %v617, -1e+30
    %v667 = vsel %vm651, %v618, -1e+30
    %v668 = vsel %vm652, %v619, -1e+30
    %v669 = vsel %vm653, %v620, -1e+30
    %v670 = vsel %vm654, %v621, -1e+30
    %v671 = vsel %vm655, %v622, -1e+30
    %v672 = vsel %vm656, %v623, -1e+30
    %v673 = vsel %vm657, %v624, -1e+30
    %v674 = vsel %vm658, %v625, -1e+30
    %v675 = vsel %vm659, %v626, -1e+30
    %v676 = vmax.f32 %v660, %v664
    %v677 = vmax.f32 %v661, %v665
    %v678 = vmax.f32 %v662, %v666
    %v679 = vmax.f32 %v663, %v667
    %v680 = vmax.f32 %v676, %v668
    %v681 = vmax.f32 %v677, %v669
    %v682 = vmax.f32 %v678, %v670
    %v683 = vmax.f32 %v679, %v671
    %v684 = vmax.f32 %v680, %v672
    %v685 = vmax.f32 %v681, %v673
    %v686 = vmax.f32 %v682, %v674
    %v687 = vmax.f32 %v683, %v675
    %v688 = vmax.f32 %v684, %v685
    %v689 = vmax.f32 %v686, %v687
    %v690 = vmax.f32 %v688, %v689
    %v691 = vrot.slane %v690, 4
    %v692 = vmax.f32 %v690, %v691
    %v693 = vrot.slane %v692, 2
    %v694 = vmax.f32 %v692, %v693
    %v695 = vrot.slane %v694, 1
    %v696 = vmax.f32 %v694, %v695
    %v697 = vsub.f32 %v660, %v696
    %v698 = vsub.f32 %v661, %v696
    %v699 = vsub.f32 %v662, %v696
    %v700 = vsub.f32 %v663, %v696
    %v701 = vsub.f32 %v664, %v696
    %v702 = vsub.f32 %v665, %v696
    %v703 = vsub.f32 %v666, %v696
    %v704 = vsub.f32 %v667, %v696
    %v705 = vsub.f32 %v668, %v696
    %v706 = vsub.f32 %v669, %v696
    %v707 = vsub.f32 %v670, %v696
    %v708 = vsub.f32 %v671, %v696
    %v709 = vsub.f32 %v672, %v696
    %v710 = vsub.f32 %v673, %v696
    %v711 = vsub.f32 %v674, %v696
    %v712 = vsub.f32 %v675, %v696
    %v713 = vmul.f32 %v697, 1.442695
    %v714 = vpow.pop %v713
    %v715 = vmul.f32 %v698, 1.442695
    %v716 = vpow.pop %v715
    %v717 = vmul.f32 %v699, 1.442695
    %v718 = vpow.pop %v717
    %v719 = vmul.f32 %v700, 1.442695
    %v720 = vpow.pop %v719
    %v721 = vmul.f32 %v701, 1.442695
    %v722 = vpow.pop %v721
    %v723 = vmul.f32 %v702, 1.442695
    %v724 = vpow.pop %v723
    %v725 = vmul.f32 %v703, 1.442695
    %v726 = vpow.pop %v725
    %v727 = vmul.f32 %v704, 1.442695
    %v728 = vpow.pop %v727
    %v729 = vmul.f32 %v705, 1.442695
    %v730 = vpow.pop %v729
    %v731 = vmul.f32 %v706, 1.442695
    %v732 = vpow.pop %v731
    %v733 = vmul.f32 %v707, 1.442695
    %v734 = vpow.pop %v733
    %v735 = vmul.f32 %v708, 1.442695
    %v736 = vpow.pop %v735
    %v737 = vmul.f32 %v709, 1.442695
    %v738 = vpow.pop %v737
    %v739 = vmul.f32 %v710, 1.442695
    %v740 = vpow.pop %v739
    %v741 = vmul.f32 %v711, 1.442695
    %v742 = vpow.pop %v741
    %v743 = vmul.f32 %v712, 1.442695
    %v744 = vpow.pop %v743
    %v745 = vadd.f32 %v714, %v716
    %v746 = vadd.f32 %v745, %v718
    %v747 = vadd.f32 %v746, %v720
    %v748 = vadd.f32 %v747, %v722
    %v749 = vadd.f32 %v748, %v724
    %v750 = vadd.f32 %v749, %v726
    %v751 = vadd.f32 %v750, %v728
    %v752 = vadd.f32 %v751, %v730
    %v753 = vadd.f32 %v752, %v732
    %v754 = vadd.f32 %v753, %v734
    %v755 = vadd.f32 %v754, %v736
    %v756 = vadd.f32 %v755, %v738
    %v757 = vadd.f32 %v756, %v740
    %v758 = vadd.f32 %v757, %v742
    %v759 = vadd.f32 %v758, %v744
    %v760 = vrot.slane %v759, 4
    %v761 = vadd.f32 %v759, %v760
    %v762 = vrot.slane %v761, 2
    %v763 = vadd.f32 %v761, %v762
    %v764 = vrot.slane %v763, 1
    %v765 = vadd.f32 %v763, %v764
    %v766 = vrcp.pop %v765
    %v767 = vmul.f32 %v765, %v766
    %v768 = vsub.f32 1.0, %v767
    %v769 = vmul.f32 %v766, %v768
    %v770 = vadd.f32 %v766, %v769
    %vm771 = vweird.f32 %v765
    %vm772 = vweird.f32 %v766
    %vm773 = vmor %vm771, %vm772
    %v774 = vsel %vm773, %v766, %v770
    %v775 = vand.u32 2147483647, %v765
    %vm776 = vcmp.eq.f32.partialorder %v775, 8.507059e+37
    %v777 = vand.u32 %v765, 2147483648
    %v778 = vor.u32 1.1754944e-38, %v777
    %v779 = vsel %vm776, %v778, %v774
    %v780 = vmul.f32 %v714, %v779
    %v781 = vmul.f32 %v716, %v779
    %v782 = vmul.f32 %v718, %v779
    %v783 = vmul.f32 %v720, %v779
    %v784 = vmul.f32 %v722, %v779
    %v785 = vmul.f32 %v724, %v779
    %v786 = vmul.f32 %v726, %v779
    %v787 = vmul.f32 %v728, %v779
    %v788 = vmul.f32 %v730, %v779
    %v789 = vmul.f32 %v732, %v779
    %v790 = vmul.f32 %v734, %v779
    %v791 = vmul.f32 %v736, %v779
    %v792 = vmul.f32 %v738, %v779
    %v793 = vmul.f32 %v740, %v779
    %v794 = vmul.f32 %v742, %v779
    %v795 = vmul.f32 %v744, %v779
    %v796 = vlaneseq
    %v797 = vand.u32 %v796, 127
    %v798 = vstv %s264
    %v799 = vadd.s32 %v797, %v798
    %vm800 = vcmp.lt.s32.totalorder %v799, 8
    %v801 = vsel %vm800, %v780, 0.0
    %v802 = vsel %vm800, %v781, 0.0
    %v803 = vsel %vm800, %v782, 0.0
    %v804 = vsel %vm800, %v783, 0.0
    %v805 = vsel %vm800, %v784, 0.0
    %v806 = vsel %vm800, %v785, 0.0
    %v807 = vsel %vm800, %v786, 0.0
    %v808 = vsel %vm800, %v787, 0.0
    %v809 = vsel %vm800, %v788, 0.0
    %v810 = vsel %vm800, %v789, 0.0
    %v811 = vsel %vm800, %v790, 0.0
    %v812 = vsel %vm800, %v791, 0.0
    %v813 = vsel %vm800, %v792, 0.0
    %v814 = vsel %vm800, %v793, 0.0
    %v815 = vsel %vm800, %v794, 0.0
    %v816 = vsel %vm800, %v795, 0.0
    %817 = vst [vmem:[#allocation10] sm:$0xff] %v801
    %818 = vst [vmem:[#allocation10 + $0x8] sm:$0xff] %v802
    %819 = vst [vmem:[#allocation10 + $0x10] sm:$0xff] %v803
    %820 = vst [vmem:[#allocation10 + $0x18] sm:$0xff] %v804
    %821 = vst [vmem:[#allocation10 + $0x20] sm:$0xff] %v805
    %822 = vst [vmem:[#allocation10 + $0x28] sm:$0xff] %v806
    %823 = vst [vmem:[#allocation10 + $0x30] sm:$0xff] %v807
    %824 = vst [vmem:[#allocation10 + $0x38] sm:$0xff] %v808
    %825 = vst [vmem:[#allocation10 + $0x40] sm:$0xff] %v809
    %826 = vst [vmem:[#allocation10 + $0x48] sm:$0xff] %v810
    %827 = vst [vmem:[#allocation10 + $0x50] sm:$0xff] %v811
    %828 = vst [vmem:[#allocation10 + $0x58] sm:$0xff] %v812
    %829 = vst [vmem:[#allocation10 + $0x60] sm:$0xff] %v813
    %830 = vst [vmem:[#allocation10 + $0x68] sm:$0xff] %v814
    %831 = vst [vmem:[#allocation10 + $0x70] sm:$0xff] %v815
    %832 = vst [vmem:[#allocation10 + $0x78] sm:$0xff] %v816
    %v833 = vld [vmem:[#allocation9] sm:$0xff]
    %v834 = vld [vmem:[#allocation9 + $0x8] sm:$0xff]
    %v835 = vld [vmem:[#allocation9 + $0x10] sm:$0xff]
    %v836 = vld [vmem:[#allocation9 + $0x18] sm:$0xff]
    %v837 = vld [vmem:[#allocation9 + $0x20] sm:$0xff]
    %v838 = vld [vmem:[#allocation9 + $0x28] sm:$0xff]
    %v839 = vld [vmem:[#allocation9 + $0x30] sm:$0xff]
    %v840 = vld [vmem:[#allocation9 + $0x38] sm:$0xff]
    %v841 = vld [vmem:[#allocation9 + $0x40] sm:$0xff]
    %v842 = vld [vmem:[#allocation9 + $0x48] sm:$0xff]
    %v843 = vld [vmem:[#allocation9 + $0x50] sm:$0xff]
    %v844 = vld [vmem:[#allocation9 + $0x58] sm:$0xff]
    %v845 = vld [vmem:[#allocation9 + $0x60] sm:$0xff]
    %v846 = vld [vmem:[#allocation9 + $0x68] sm:$0xff]
    %v847 = vld [vmem:[#allocation9 + $0x70] sm:$0xff]
    %v848 = vld [vmem:[#allocation9 + $0x78] sm:$0xff]
    %v849 = vpack.c.bf16 %v802, %v801
    %v850 = vpack.c.bf16 %v804, %v803
    %v851 = vpack.c.bf16 %v806, %v805
    %v852 = vpack.c.bf16 %v808, %v807
    %v853 = vpack.c.bf16 %v810, %v809
    %v854 = vpack.c.bf16 %v812, %v811
    %v855 = vpack.c.bf16 %v814, %v813
    %v856 = vpack.c.bf16 %v816, %v815
    %v857 = vpack.c.bf16 %v453, %v451
    %v858 = vpack.c.bf16 %v458, %v456
    %v859 = vpack.c.bf16 %v463, %v461
    %v860 = vpack.c.bf16 %v468, %v466
    %v861 = vpack.c.bf16 %v473, %v471
    %v862 = vpack.c.bf16 %v478, %v476
    %v863 = vpack.c.bf16 %v483, %v481
    %v864 = vpack.c.bf16 %v488, %v486
    %865 = vmatpush.bf16.msra.mxu0 %v864
    %866 = vmatpush.bf16.msra.mxu0 %v863
    %867 = vmatpush.bf16.msra.mxu0 %v862
    %868 = vmatpush.bf16.msra.mxu0 %v861
    %869 = vmatpush.bf16.msra.mxu0 %v860
    %870 = vmatpush.bf16.msra.mxu0 %v859
    %871 = vmatpush.bf16.msra.mxu0 %v858
    %872 = vmatpush.bf16.msra.mxu0 %v857
    %873 = vmatmul.bf16.gmra.mxu0 %v849
    %v874 = vpop.f32.mrf.mxu0
    %v875 = vadd.f32 0.0, %v874
    %v876 = vpop.f32.mrf.mxu0
    %v877 = vadd.f32 0.0, %v876
    %878 = vmatmul.bf16.gmra.mxu0 %v850
    %v879 = vpop.f32.mrf.mxu0
    %v880 = vadd.f32 0.0, %v879
    %v881 = vpop.f32.mrf.mxu0
    %v882 = vadd.f32 0.0, %v881
    %883 = vmatmul.bf16.gmra.mxu0 %v851
    %v884 = vpop.f32.mrf.mxu0
    %v885 = vadd.f32 0.0, %v884
    %v886 = vpop.f32.mrf.mxu0
    %v887 = vadd.f32 0.0, %v886
    %888 = vmatmul.bf16.gmra.mxu0 %v852
    %v889 = vpop.f32.mrf.mxu0
    %v890 = vadd.f32 0.0, %v889
    %v891 = vpop.f32.mrf.mxu0
    %v892 = vadd.f32 0.0, %v891
    %893 = vmatmul.bf16.gmra.mxu0 %v853
    %v894 = vpop.f32.mrf.mxu0
    %v895 = vadd.f32 0.0, %v894
    %v896 = vpop.f32.mrf.mxu0
    %v897 = vadd.f32 0.0, %v896
    %898 = vmatmul.bf16.gmra.mxu0 %v854
    %v899 = vpop.f32.mrf.mxu0
    %v900 = vadd.f32 0.0, %v899
    %v901 = vpop.f32.mrf.mxu0
    %v902 = vadd.f32 0.0, %v901
    %903 = vmatmul.bf16.gmra.mxu0 %v855
    %v904 = vpop.f32.mrf.mxu0
    %v905 = vadd.f32 0.0, %v904
    %v906 = vpop.f32.mrf.mxu0
    %v907 = vadd.f32 0.0, %v906
    %908 = vmatmul.bf16.gmra.mxu0 %v856
    %v909 = vpop.f32.mrf.mxu0
    %v910 = vadd.f32 0.0, %v909
    %v911 = vpop.f32.mrf.mxu0
    %v912 = vadd.f32 0.0, %v911
    %913 = vdwg.mxu0
    %v914 = vadd.f32 %v833, %v875
    %v915 = vadd.f32 %v834, %v877
    %v916 = vadd.f32 %v835, %v880
    %v917 = vadd.f32 %v836, %v882
    %v918 = vadd.f32 %v837, %v885
    %v919 = vadd.f32 %v838, %v887
    %v920 = vadd.f32 %v839, %v890
    %v921 = vadd.f32 %v840, %v892
    %v922 = vadd.f32 %v841, %v895
    %v923 = vadd.f32 %v842, %v897
    %v924 = vadd.f32 %v843, %v900
    %v925 = vadd.f32 %v844, %v902
    %v926 = vadd.f32 %v845, %v905
    %v927 = vadd.f32 %v846, %v907
    %v928 = vadd.f32 %v847, %v910
    %v929 = vadd.f32 %v848, %v912
    %930 = vst [vmem:[#allocation9] sm:$0xff] %v914
    %931 = vst [vmem:[#allocation9 + $0x8] sm:$0xff] %v915
    %932 = vst [vmem:[#allocation9 + $0x10] sm:$0xff] %v916
    %933 = vst [vmem:[#allocation9 + $0x18] sm:$0xff] %v917
    %934 = vst [vmem:[#allocation9 + $0x20] sm:$0xff] %v918
    %935 = vst [vmem:[#allocation9 + $0x28] sm:$0xff] %v919
    %936 = vst [vmem:[#allocation9 + $0x30] sm:$0xff] %v920
    %937 = vst [vmem:[#allocation9 + $0x38] sm:$0xff] %v921
    %938 = vst [vmem:[#allocation9 + $0x40] sm:$0xff] %v922
    %939 = vst [vmem:[#allocation9 + $0x48] sm:$0xff] %v923
    %940 = vst [vmem:[#allocation9 + $0x50] sm:$0xff] %v924
    %941 = vst [vmem:[#allocation9 + $0x58] sm:$0xff] %v925
    %942 = vst [vmem:[#allocation9 + $0x60] sm:$0xff] %v926
    %943 = vst [vmem:[#allocation9 + $0x68] sm:$0xff] %v927
    %944 = vst [vmem:[#allocation9 + $0x70] sm:$0xff] %v928
    %945 = vst [vmem:[#allocation9 + $0x78] sm:$0xff] %v929
    // Predicated region
    $region38: #{tpu_custom_call.1} parent=1 // pred_check
      _
    $region39: #{tpu_custom_call.1} parent=1 // pred_check_branch
      %947 = sbr.rel (0) target = $region41
    $region40: #{tpu_custom_call.1} parent=1 // pred_region
      %949 = vsyncadd [#allocation5], 0
      %s950 = sshll.u32 [#allocation9], 4
      %s951 = int_to_ptr.vmem [resolvable:$true] %s950
      %s952 = sshll.u32 %s5, 4
      %s953 = int_to_ptr.hbm [resolvable:$true] %s952
      %958 = dma.vmem_to_hbm [thread:$0]  %s951, 2048, %s953, [#allocation5], 128, 128, 8
    $region41: #{tpu_custom_call.1} parent=1 // pred_fallthru
      _
    // Predicated region
    $region42: #{tpu_custom_call.1} parent=1 // pred_check
      _
    $region43: #{tpu_custom_call.1} parent=1 // pred_check_branch
      %960 = sbr.rel (0) target = $region45
    $region44: #{tpu_custom_call.1} parent=1 // pred_region
      %962 = vsyncadd [#allocation11], 0
      %s963 = sshll.u32 [#allocation10], 4
      %s964 = int_to_ptr.vmem [resolvable:$true] %s963
      %s965 = sshll.u32 %s6, 4
      %s966 = int_to_ptr.hbm [resolvable:$true] %s965
      %971 = dma.vmem_to_hbm [thread:$0]  %s964, 2048, %s966, [#allocation11], 128, 128, 8
    $region45: #{tpu_custom_call.1} parent=1 // pred_fallthru
      _
    // Predicated region
    $region46: #{tpu_custom_call.1} parent=1 // pred_check
      _
    $region47: #{tpu_custom_call.1} parent=1 // pred_check_branch
      %973 = sbr.rel (0) target = $region49
    $region48: #{tpu_custom_call.1} parent=1 // pred_region
      %975 = dma.done [#allocation5], 2048
    $region49: #{tpu_custom_call.1} parent=1 // pred_fallthru
      _
    // Predicated region
    $region50: #{tpu_custom_call.1} parent=1 // pred_check
      _
    $region51: #{tpu_custom_call.1} parent=1 // pred_check_branch
      %977 = sbr.rel (0) target = $region53
    $region52: #{tpu_custom_call.1} parent=1 // pred_region
      %979 = dma.done [#allocation11], 2048
    $region53: #{tpu_custom_call.1} parent=1 // pred_fallthru
      _
    %980 = vsyncpa [#allocation4], 1
    %981 = vsyncpa [#allocation7], 1
    %982 = vsyncpa [#allocation5], 1
    %983 = vsyncpa [#allocation11], 1

// kernel: tpu_custom_call.1
$region0: #{tpu_custom_call.1}
  #allocation0 [shape = 'u32[]', space=smem, size = 0x4, offset = 0x4, fixed_abs, tag = 'smem constant byte address 0x4 - core index']
  #allocation1 [shape = 'u32[72,128]{1,0:T(1,128)}', space=vmem, size = 0x9000, scoped, tag = 'internal scratch']
  #allocation2 [shape = 'bf16[128,128]{1,0:T(8,128)(2,1)}', space=vmem, size = 0x8000, scoped, tag = 'scratch operand']
  %s0 = inlined_call_operand.hbm [shape: f32[128,128], index: 0, kind: input, shape index: {}]
  %s1 = inlined_call_operand.hbm [shape: bf16[128,128], index: 1, kind: input, shape index: {}]
  %s2 = inlined_call_operand.vmem [shape: f32[1,128], index: 2, kind: input, shape index: {}]
  %s3 = inlined_call_operand.hbm [shape: bf16[128,256], index: 3, kind: input, shape index: {}]
  %s4 = inlined_call_operand.vmem [shape: f32[1,256], index: 4, kind: input, shape index: {}]
  %s5 = inlined_call_operand.hbm [shape: f32[128,128], index: 5, kind: output, shape index: {0}]
  %s6 = inlined_call_operand.hbm [shape: f32[128,128], index: 6, kind: output, shape index: {1}]
  %7 = xla_tuple %s5, %s6
  %s8 = sld [smem:[#allocation0]]
  $region54: #{tpu_custom_call.1} parent=0
    _
  %s10 = ssub.s32 1, %s8
  %s11 = scalar_select 0, %s10, %s8
  $region1: #{tpu_custom_call.1} parent=0
    #allocation3 [shape = 'u8[65536]{0}', space=vmem, size = 0x10000, scoped, tag = 'input window, operand 0, single buffered']
    #allocation4 [shape = 's32[1]{0}', space=sflag, size = 0x4, scoped, tag = 'scoped memory for tpu_custom_call.1']
    #allocation5 [shape = 's32[1]{0}', space=sflag, size = 0x4, scoped, tag = 'scoped memory for tpu_custom_call.1']
    #allocation6 [shape = 'u8[32768]{0}', space=vmem, size = 0x8000, scoped, tag = 'input window, operand 1, single buffered']
    #allocation7 [shape = 's32[1]{0}', space=sflag, size = 0x4, scoped, tag = 'scoped memory for tpu_custom_call.1']
    #allocation8 [shape = 'u8[65536]{0}', space=vmem, size = 0x10000, scoped, tag = 'input window, operand 3, single buffered']
    #allocation9 [shape = 'u8[65536]{0}', space=vmem, size = 0x10000, scoped, tag = 'output window, operand 0, single buffered']
    #allocation10 [shape = 'u8[65536]{0}', space=vmem, size = 0x10000, scoped, tag = 'output window, operand 1, single buffered']
    #allocation11 [shape = 's32[1]{0}', space=sflag, size = 0x4, scoped, tag = 'scoped memory for tpu_custom_call.1']
    %12 = vsyncpa [#allocation4], 0
    %13 = vsyncpa [#allocation7], 0
    %14 = vsyncpa [#allocation5], 0
    %15 = vsyncpa [#allocation11], 0
    // Predicated region
    $region2: #{tpu_custom_call.1} parent=1 // pred_check
      _
    $region3: #{tpu_custom_call.1} parent=1 // pred_check_branch
      %17 = sbr.rel (0) target = $region5
    $region4: #{tpu_custom_call.1} parent=1 // pred_region
      %19 = vsyncadd [#allocation4], 0
      %s20 = sshll.u32 %s0, 4
      %s21 = int_to_ptr.hbm [resolvable:$true] %s20
      %s22 = sshll.u32 [#allocation3], 4
      %s23 = int_to_ptr.vmem [resolvable:$true] %s22
      %28 = dma.hbm_to_vmem [thread:$0]  %s21, 2048, %s23, [#allocation4], 128, 128, 8
    $region5: #{tpu_custom_call.1} parent=1 // pred_fallthru
      _
    // Predicated region
    $region6: #{tpu_custom_call.1} parent=1 // pred_check
      _
    $region7: #{tpu_custom_call.1} parent=1 // pred_check_branch
      %30 = sbr.rel (0) target = $region9
    $region8: #{tpu_custom_call.1} parent=1 // pred_region
      %32 = vsyncadd [#allocation7], 0
      %s33 = sshll.u32 %s1, 4
      %s34 = int_to_ptr.hbm [resolvable:$true] %s33
      %s35 = sshll.u32 [#allocation6], 4
      %s36 = int_to_ptr.vmem [resolvable:$true] %s35
      %41 = dma.hbm_to_vmem [thread:$0]  %s34, 1024, %s36, [#allocation7], 64, 64, 4
    $region9: #{tpu_custom_call.1} parent=1 // pred_fallthru
      _
    // Predicated region
    $region10: #{tpu_custom_call.1} parent=1 // pred_check
      _
    $region11: #{tpu_custom_call.1} parent=1 // pred_check_branch
      %43 = sbr.rel (0) target = $region13
    $region12: #{tpu_custom_call.1} parent=1 // pred_region
      _
    $region13: #{tpu_custom_call.1} parent=1 // pred_fallthru
      _
    // Predicated region
    $region14: #{tpu_custom_call.1} parent=1 // pred_check
      _
    $region15: #{tpu_custom_call.1} parent=1 // pred_check_branch
      %45 = sbr.rel (0) target = $region17
    $region16: #{tpu_custom_call.1} parent=1 // pred_region
      %47 = vsyncadd [#allocation7], 0
      %s48 = sshll.u32 %s3, 4
      %s49 = int_to_ptr.hbm [resolvable:$true] %s48
      %s50 = sshll.u32 [#allocation8], 4
      %s51 = int_to_ptr.vmem [resolvable:$true] %s50
      %56 = dma.hbm_to_vmem [thread:$0]  %s49, 2048, %s51, [#allocation7], 128, 128, 8
    $region17: #{tpu_custom_call.1} parent=1 // pred_fallthru
      _
    // Predicated region
    $region18: #{tpu_custom_call.1} parent=1 // pred_check
      _
    $region19: #{tpu_custom_call.1} parent=1 // pred_check_branch
      %58 = sbr.rel (0) target = $region21
    $region20: #{tpu_custom_call.1} parent=1 // pred_region
      _
    $region21: #{tpu_custom_call.1} parent=1 // pred_fallthru
      _
    // Predicated region
    $region22: #{tpu_custom_call.1} parent=1 // pred_check
      _
    $region23: #{tpu_custom_call.1} parent=1 // pred_check_branch
      %60 = sbr.rel (0) target = $region25
    $region24: #{tpu_custom_call.1} parent=1 // pred_region
      %62 = dma.done [#allocation4], 2048
    $region25: #{tpu_custom_call.1} parent=1 // pred_fallthru
      _
    // Predicated region
    $region26: #{tpu_custom_call.1} parent=1 // pred_check
      _
    $region27: #{tpu_custom_call.1} parent=1 // pred_check_branch
      %64 = sbr.rel (0) target = $region29
    $region28: #{tpu_custom_call.1} parent=1 // pred_region
      %66 = dma.done [#allocation7], 1024
    $region29: #{tpu_custom_call.1} parent=1 // pred_fallthru
      _
    // Predicated region
    $region30: #{tpu_custom_call.1} parent=1 // pred_check
      _
    $region31: #{tpu_custom_call.1} parent=1 // pred_check_branch
      %68 = sbr.rel (0) target = $region33
    $region32: #{tpu_custom_call.1} parent=1 // pred_region
      %70 = dma.done [#allocation7], 2048
    $region33: #{tpu_custom_call.1} parent=1 // pred_fallthru
      _
    %p71 = scmp.eq.s32.totalorder 0, 0
    // Predicated region
    $region34: #{tpu_custom_call.1} parent=1 // pred_check
      %p72 = pneg %p71
    $region35: #{tpu_custom_call.1} parent=1 // pred_check_branch
      %74 = sbr.rel (%p72) target = $region37
    $region36: #{tpu_custom_call.1} parent=1 // pred_region
      %v75 = vld [vmem:[#allocation3] sm:$0xff]
      %v76 = vld [vmem:[#allocation3 + $0x8] sm:$0xff]
      %v77 = vld [vmem:[#allocation3 + $0x10] sm:$0xff]
      %v78 = vld [vmem:[#allocation3 + $0x18] sm:$0xff]
      %v79 = vld [vmem:[#allocation3 + $0x20] sm:$0xff]
      %v80 = vld [vmem:[#allocation3 + $0x28] sm:$0xff]
      %v81 = vld [vmem:[#allocation3 + $0x30] sm:$0xff]
      %v82 = vld [vmem:[#allocation3 + $0x38] sm:$0xff]
      %v83 = vld [vmem:[#allocation3 + $0x40] sm:$0xff]
      %v84 = vld [vmem:[#allocation3 + $0x48] sm:$0xff]
      %v85 = vld [vmem:[#allocation3 + $0x50] sm:$0xff]
      %v86 = vld [vmem:[#allocation3 + $0x58] sm:$0xff]
      %v87 = vld [vmem:[#allocation3 + $0x60] sm:$0xff]
      %v88 = vld [vmem:[#allocation3 + $0x68] sm:$0xff]
      %v89 = vld [vmem:[#allocation3 + $0x70] sm:$0xff]
      %v90 = vld [vmem:[#allocation3 + $0x78] sm:$0xff]
      %v91 = vpack.c.bf16 %v76, %v75
      %v92 = vpack.c.bf16 %v78, %v77
      %v93 = vpack.c.bf16 %v80, %v79
      %v94 = vpack.c.bf16 %v82, %v81
      %v95 = vpack.c.bf16 %v84, %v83
      %v96 = vpack.c.bf16 %v86, %v85
      %v97 = vpack.c.bf16 %v88, %v87
      %v98 = vpack.c.bf16 %v90, %v89
      %v99 = vld [vmem:[#allocation6] sm:$0xf]
      %v100 = vld [vmem:[#allocation6 + $0x4] sm:$0xf]
      %v101 = vld [vmem:[#allocation6 + $0x8] sm:$0xf]
      %v102 = vld [vmem:[#allocation6 + $0xc] sm:$0xf]
      %v103 = vld [vmem:[#allocation6 + $0x10] sm:$0xf]
      %v104 = vld [vmem:[#allocation6 + $0x14] sm:$0xf]
      %v105 = vld [vmem:[#allocation6 + $0x18] sm:$0xf]
      %v106 = vld [vmem:[#allocation6 + $0x1c] sm:$0xf]
      %v107 = vld [vmem:[#allocation6 + $0x20] sm:$0xf]
      %v108 = vld [vmem:[#allocation6 + $0x24] sm:$0xf]
      %v109 = vld [vmem:[#allocation6 + $0x28] sm:$0xf]
      %v110 = vld [vmem:[#allocation6 + $0x2c] sm:$0xf]
      %v111 = vld [vmem:[#allocation6 + $0x30] sm:$0xf]
      %v112 = vld [vmem:[#allocation6 + $0x34] sm:$0xf]
      %v113 = vld [vmem:[#allocation6 + $0x38] sm:$0xf]
      %v114 = vld [vmem:[#allocation6 + $0x3c] sm:$0xf]
      %v115 = vld [vmem:[%s2] sm:$0x1]
      %v117 = vperm.slane %v115, 0
      %v135 = vunpack.c.l.b16 %v99
      %v136 = vunpack.c.l.b16 %v100
      %v137 = vunpack.c.l.b16 %v101
      %v138 = vunpack.c.l.b16 %v102
      %v139 = vunpack.c.l.b16 %v103
      %v140 = vunpack.c.l.b16 %v104
      %v141 = vunpack.c.l.b16 %v105
      %v142 = vunpack.c.l.b16 %v106
      %v143 = vunpack.c.l.b16 %v107
      %v144 = vunpack.c.l.b16 %v108
      %v145 = vunpack.c.l.b16 %v109
      %v146 = vunpack.c.l.b16 %v110
      %v147 = vunpack.c.l.b16 %v111
      %v148 = vunpack.c.l.b16 %v112
      %v149 = vunpack.c.l.b16 %v113
      %v150 = vunpack.c.l.b16 %v114
      %v151 = vpack.c.b16 %v136, %v135
      %v152 = vpack.c.b16 %v138, %v137
      %v153 = vpack.c.b16 %v140, %v139
      %v154 = vpack.c.b16 %v142, %v141
      %v155 = vpack.c.b16 %v144, %v143
      %v156 = vpack.c.b16 %v146, %v145
      %v157 = vpack.c.b16 %v148, %v147
      %v158 = vpack.c.b16 %v150, %v149
      %167 = vmatpush.bf16.msra.mxu0 %v158
      %168 = vmatpush.bf16.msra.mxu0 %v157
      %169 = vmatpush.bf16.msra.mxu0 %v156
      %170 = vmatpush.bf16.msra.mxu0 %v155
      %171 = vmatpush.bf16.msra.mxu0 %v154
      %172 = vmatpush.bf16.msra.mxu0 %v153
      %173 = vmatpush.bf16.msra.mxu0 %v152
      %174 = vmatpush.bf16.msra.mxu0 %v151
      %175 = vmatmul.bf16.gmra.mxu0 %v91
      %v176 = vpop.f32.mrf.mxu0
      %v177 = vadd.f32 %v117, %v176
      %v178 = vpop.f32.mrf.mxu0
      %v179 = vadd.f32 %v117, %v178
      %180 = vmatmul.bf16.gmra.mxu0 %v92
      %v181 = vpop.f32.mrf.mxu0
      %v182 = vadd.f32 %v117, %v181
      %v183 = vpop.f32.mrf.mxu0
      %v184 = vadd.f32 %v117, %v183
      %185 = vmatmul.bf16.gmra.mxu0 %v93
      %v186 = vpop.f32.mrf.mxu0
      %v187 = vadd.f32 %v117, %v186
      %v188 = vpop.f32.mrf.mxu0
      %v189 = vadd.f32 %v117, %v188
      %190 = vmatmul.bf16.gmra.mxu0 %v94
      %v191 = vpop.f32.mrf.mxu0
      %v192 = vadd.f32 %v117, %v191
      %v193 = vpop.f32.mrf.mxu0
      %v194 = vadd.f32 %v117, %v193
      %195 = vmatmul.bf16.gmra.mxu0 %v95
      %v196 = vpop.f32.mrf.mxu0
      %v197 = vadd.f32 %v117, %v196
      %v198 = vpop.f32.mrf.mxu0
      %v199 = vadd.f32 %v117, %v198
      %200 = vmatmul.bf16.gmra.mxu0 %v96
      %v201 = vpop.f32.mrf.mxu0
      %v202 = vadd.f32 %v117, %v201
      %v203 = vpop.f32.mrf.mxu0
      %v204 = vadd.f32 %v117, %v203
      %205 = vmatmul.bf16.gmra.mxu0 %v97
      %v206 = vpop.f32.mrf.mxu0
      %v207 = vadd.f32 %v117, %v206
      %v208 = vpop.f32.mrf.mxu0
      %v209 = vadd.f32 %v117, %v208
      %210 = vmatmul.bf16.gmra.mxu0 %v98
      %v211 = vpop.f32.mrf.mxu0
      %v212 = vadd.f32 %v117, %v211
      %v213 = vpop.f32.mrf.mxu0
      %v214 = vadd.f32 %v117, %v213
      %215 = vdwg.mxu0
      %v216 = vpack.c.bf16 %v177, %v177
      %v217 = vpack.c.bf16 %v179, %v179
      %v218 = vpack.c.bf16 %v182, %v182
      %v219 = vpack.c.bf16 %v184, %v184
      %v220 = vpack.c.bf16 %v187, %v187
      %v221 = vpack.c.bf16 %v189, %v189
      %v222 = vpack.c.bf16 %v192, %v192
      %v223 = vpack.c.bf16 %v194, %v194
      %v224 = vpack.c.bf16 %v197, %v197
      %v225 = vpack.c.bf16 %v199, %v199
      %v226 = vpack.c.bf16 %v202, %v202
      %v227 = vpack.c.bf16 %v204, %v204
      %v228 = vpack.c.bf16 %v207, %v207
      %v229 = vpack.c.bf16 %v209, %v209
      %v230 = vpack.c.bf16 %v212, %v212
      %v231 = vpack.c.bf16 %v214, %v214
      %232 = vst [vmem:[#allocation2] sm:$0xf] %v216
      %233 = vst [vmem:[#allocation2 + $0x4] sm:$0xf] %v217
      %234 = vst [vmem:[#allocation2 + $0x8] sm:$0xf] %v218
      %235 = vst [vmem:[#allocation2 + $0xc] sm:$0xf] %v219
      %236 = vst [vmem:[#allocation2 + $0x10] sm:$0xf] %v220
      %237 = vst [vmem:[#allocation2 + $0x14] sm:$0xf] %v221
      %238 = vst [vmem:[#allocation2 + $0x18] sm:$0xf] %v222
      %239 = vst [vmem:[#allocation2 + $0x1c] sm:$0xf] %v223
      %240 = vst [vmem:[#allocation2 + $0x20] sm:$0xf] %v224
      %241 = vst [vmem:[#allocation2 + $0x24] sm:$0xf] %v225
      %242 = vst [vmem:[#allocation2 + $0x28] sm:$0xf] %v226
      %243 = vst [vmem:[#allocation2 + $0x2c] sm:$0xf] %v227
      %244 = vst [vmem:[#allocation2 + $0x30] sm:$0xf] %v228
      %245 = vst [vmem:[#allocation2 + $0x34] sm:$0xf] %v229
      %246 = vst [vmem:[#allocation2 + $0x38] sm:$0xf] %v230
      %247 = vst [vmem:[#allocation2 + $0x3c] sm:$0xf] %v231
      %248 = vst [vmem:[#allocation9] sm:$0xff] 0.0
      %249 = vst [vmem:[#allocation9 + $0x8] sm:$0xff] 0.0
      %250 = vst [vmem:[#allocation9 + $0x10] sm:$0xff] 0.0
      %251 = vst [vmem:[#allocation9 + $0x18] sm:$0xff] 0.0
      %252 = vst [vmem:[#allocation9 + $0x20] sm:$0xff] 0.0
      %253 = vst [vmem:[#allocation9 + $0x28] sm:$0xff] 0.0
      %254 = vst [vmem:[#allocation9 + $0x30] sm:$0xff] 0.0
      %255 = vst [vmem:[#allocation9 + $0x38] sm:$0xff] 0.0
      %256 = vst [vmem:[#allocation9 + $0x40] sm:$0xff] 0.0
      %257 = vst [vmem:[#allocation9 + $0x48] sm:$0xff] 0.0
      %258 = vst [vmem:[#allocation9 + $0x50] sm:$0xff] 0.0
      %259 = vst [vmem:[#allocation9 + $0x58] sm:$0xff] 0.0
      %260 = vst [vmem:[#allocation9 + $0x60] sm:$0xff] 0.0
      %261 = vst [vmem:[#allocation9 + $0x68] sm:$0xff] 0.0
      %262 = vst [vmem:[#allocation9 + $0x70] sm:$0xff] 0.0
      %263 = vst [vmem:[#allocation9 + $0x78] sm:$0xff] 0.0
    $region37: #{tpu_custom_call.1} parent=1 // pred_fallthru
      _
    %s264 = smul.u32 0, 128
    %s265 = scalar_lea.vmem [#allocation3], %s264
    %v266 = vld [vmem:[%s265] sm:$0xff]
    %v267 = vld [vmem:[%s265 + $0x8] sm:$0xff]
    %v268 = vld [vmem:[%s265 + $0x10] sm:$0xff]
    %v269 = vld [vmem:[%s265 + $0x18] sm:$0xff]
    %v270 = vld [vmem:[%s265 + $0x20] sm:$0xff]
    %v271 = vld [vmem:[%s265 + $0x28] sm:$0xff]
    %v272 = vld [vmem:[%s265 + $0x30] sm:$0xff]
    %v273 = vld [vmem:[%s265 + $0x38] sm:$0xff]
    %v274 = vld [vmem:[%s265 + $0x40] sm:$0xff]
    %v275 = vld [vmem:[%s265 + $0x48] sm:$0xff]
    %v276 = vld [vmem:[%s265 + $0x50] sm:$0xff]
    %v277 = vld [vmem:[%s265 + $0x58] sm:$0xff]
    %v278 = vld [vmem:[%s265 + $0x60] sm:$0xff]
    %v279 = vld [vmem:[%s265 + $0x68] sm:$0xff]
    %v280 = vld [vmem:[%s265 + $0x70] sm:$0xff]
    %v281 = vld [vmem:[%s265 + $0x78] sm:$0xff]
    %v282 = vpack.c.bf16 %v267, %v266
    %v283 = vpack.c.bf16 %v269, %v268
    %v284 = vpack.c.bf16 %v271, %v270
    %v285 = vpack.c.bf16 %v273, %v272
    %v286 = vpack.c.bf16 %v275, %v274
    %v287 = vpack.c.bf16 %v277, %v276
    %v288 = vpack.c.bf16 %v279, %v278
    %v289 = vpack.c.bf16 %v281, %v280
    %v290 = vld [vmem:[#allocation8] sm:$0xff]
    %v291 = vld [vmem:[#allocation8 + $0x8] sm:$0xff]
    %v292 = vld [vmem:[#allocation8 + $0x10] sm:$0xff]
    %v293 = vld [vmem:[#allocation8 + $0x18] sm:$0xff]
    %v294 = vld [vmem:[#allocation8 + $0x20] sm:$0xff]
    %v295 = vld [vmem:[#allocation8 + $0x28] sm:$0xff]
    %v296 = vld [vmem:[#allocation8 + $0x30] sm:$0xff]
    %v297 = vld [vmem:[#allocation8 + $0x38] sm:$0xff]
    %v298 = vld [vmem:[#allocation8 + $0x40] sm:$0xff]
    %v299 = vld [vmem:[#allocation8 + $0x48] sm:$0xff]
    %v300 = vld [vmem:[#allocation8 + $0x50] sm:$0xff]
    %v301 = vld [vmem:[#allocation8 + $0x58] sm:$0xff]
    %v302 = vld [vmem:[#allocation8 + $0x60] sm:$0xff]
    %v303 = vld [vmem:[#allocation8 + $0x68] sm:$0xff]
    %v304 = vld [vmem:[#allocation8 + $0x70] sm:$0xff]
    %v305 = vld [vmem:[#allocation8 + $0x78] sm:$0xff]
    %v306 = vld [vmem:[%s4] sm:$0x3]
    %v308 = vperm.slane %v306, 0
    %v309 = vperm.slane %v306, 1
    %v328 = vunpack.c.l.b16 %v290
    %v329 = vunpack.c.h.b16 %v290
    %v330 = vunpack.c.l.b16 %v291
    %v331 = vunpack.c.h.b16 %v291
    %v332 = vunpack.c.l.b16 %v292
    %v333 = vunpack.c.h.b16 %v292
    %v334 = vunpack.c.l.b16 %v293
    %v335 = vunpack.c.h.b16 %v293
    %v336 = vunpack.c.l.b16 %v294
    %v337 = vunpack.c.h.b16 %v294
    %v338 = vunpack.c.l.b16 %v295
    %v339 = vunpack.c.h.b16 %v295
    %v340 = vunpack.c.l.b16 %v296
    %v341 = vunpack.c.h.b16 %v296
    %v342 = vunpack.c.l.b16 %v297
    %v343 = vunpack.c.h.b16 %v297
    %v344 = vunpack.c.l.b16 %v298
    %v345 = vunpack.c.h.b16 %v298
    %v346 = vunpack.c.l.b16 %v299
    %v347 = vunpack.c.h.b16 %v299
    %v348 = vunpack.c.l.b16 %v300
    %v349 = vunpack.c.h.b16 %v300
    %v350 = vunpack.c.l.b16 %v301
    %v351 = vunpack.c.h.b16 %v301
    %v352 = vunpack.c.l.b16 %v302
    %v353 = vunpack.c.h.b16 %v302
    %v354 = vunpack.c.l.b16 %v303
    %v355 = vunpack.c.h.b16 %v303
    %v356 = vunpack.c.l.b16 %v304
    %v357 = vunpack.c.h.b16 %v304
    %v358 = vunpack.c.l.b16 %v305
    %v359 = vunpack.c.h.b16 %v305
    %v360 = vpack.c.b16 %v330, %v328
    %v361 = vpack.c.b16 %v331, %v329
    %v362 = vpack.c.b16 %v334, %v332
    %v363 = vpack.c.b16 %v335, %v333
    %v364 = vpack.c.b16 %v338, %v336
    %v365 = vpack.c.b16 %v339, %v337
    %v366 = vpack.c.b16 %v342, %v340
    %v367 = vpack.c.b16 %v343, %v341
    %v368 = vpack.c.b16 %v346, %v344
    %v369 = vpack.c.b16 %v347, %v345
    %v370 = vpack.c.b16 %v350, %v348
    %v371 = vpack.c.b16 %v351, %v349
    %v372 = vpack.c.b16 %v354, %v352
    %v373 = vpack.c.b16 %v355, %v353
    %v374 = vpack.c.b16 %v358, %v356
    %v375 = vpack.c.b16 %v359, %v357
    %392 = vmatpush.bf16.msra.mxu0 %v374
    %393 = vmatpush.bf16.msra.mxu0 %v372
    %394 = vmatpush.bf16.msra.mxu0 %v370
    %395 = vmatpush.bf16.msra.mxu0 %v368
    %396 = vmatpush.bf16.msra.mxu0 %v366
    %397 = vmatpush.bf16.msra.mxu0 %v364
    %398 = vmatpush.bf16.msra.mxu0 %v362
    %399 = vmatpush.bf16.msra.mxu0 %v360
    %400 = vmatmul.bf16.gmra.mxu0 %v282
    %v401 = vpop.f32.mrf.mxu0
    %v402 = vadd.f32 %v308, %v401
    %v403 = vpop.f32.mrf.mxu0
    %v404 = vadd.f32 %v308, %v403
    %405 = vmatmul.bf16.gmra.mxu0 %v283
    %v406 = vpop.f32.mrf.mxu0
    %v407 = vadd.f32 %v308, %v406
    %v408 = vpop.f32.mrf.mxu0
    %v409 = vadd.f32 %v308, %v408
    %410 = vmatmul.bf16.gmra.mxu0 %v284
    %v411 = vpop.f32.mrf.mxu0
    %v412 = vadd.f32 %v308, %v411
    %v413 = vpop.f32.mrf.mxu0
    %v414 = vadd.f32 %v308, %v413
    %415 = vmatmul.bf16.gmra.mxu0 %v285
    %v416 = vpop.f32.mrf.mxu0
    %v417 = vadd.f32 %v308, %v416
    %v418 = vpop.f32.mrf.mxu0
    %v419 = vadd.f32 %v308, %v418
    %420 = vmatmul.bf16.gmra.mxu0 %v286
    %v421 = vpop.f32.mrf.mxu0
    %v422 = vadd.f32 %v308, %v421
    %v423 = vpop.f32.mrf.mxu0
    %v424 = vadd.f32 %v308, %v423
    %425 = vmatmul.bf16.gmra.mxu0 %v287
    %v426 = vpop.f32.mrf.mxu0
    %v427 = vadd.f32 %v308, %v426
    %v428 = vpop.f32.mrf.mxu0
    %v429 = vadd.f32 %v308, %v428
    %430 = vmatmul.bf16.gmra.mxu0 %v288
    %v431 = vpop.f32.mrf.mxu0
    %v432 = vadd.f32 %v308, %v431
    %v433 = vpop.f32.mrf.mxu0
    %v434 = vadd.f32 %v308, %v433
    %435 = vmatmul.bf16.gmra.mxu0 %v289
    %v436 = vpop.f32.mrf.mxu0
    %v437 = vadd.f32 %v308, %v436
    %v438 = vpop.f32.mrf.mxu0
    %v439 = vadd.f32 %v308, %v438
    %440 = vdwg.mxu0
    %441 = vmatpush.bf16.msra.mxu0 %v375
    %442 = vmatpush.bf16.msra.mxu0 %v373
    %443 = vmatpush.bf16.msra.mxu0 %v371
    %444 = vmatpush.bf16.msra.mxu0 %v369
    %445 = vmatpush.bf16.msra.mxu0 %v367
    %446 = vmatpush.bf16.msra.mxu0 %v365
    %447 = vmatpush.bf16.msra.mxu0 %v363
    %448 = vmatpush.bf16.msra.mxu0 %v361
    %449 = vmatmul.bf16.gmra.mxu0 %v282
    %v450 = vpop.f32.mrf.mxu0
    %v451 = vadd.f32 %v309, %v450
    %v452 = vpop.f32.mrf.mxu0
    %v453 = vadd.f32 %v309, %v452
    %454 = vmatmul.bf16.gmra.mxu0 %v283
    %v455 = vpop.f32.mrf.mxu0
    %v456 = vadd.f32 %v309, %v455
    %v457 = vpop.f32.mrf.mxu0
    %v458 = vadd.f32 %v309, %v457
    %459 = vmatmul.bf16.gmra.mxu0 %v284
    %v460 = vpop.f32.mrf.mxu0
    %v461 = vadd.f32 %v309, %v460
    %v462 = vpop.f32.mrf.mxu0
    %v463 = vadd.f32 %v309, %v462
    %464 = vmatmul.bf16.gmra.mxu0 %v285
    %v465 = vpop.f32.mrf.mxu0
    %v466 = vadd.f32 %v309, %v465
    %v467 = vpop.f32.mrf.mxu0
    %v468 = vadd.f32 %v309, %v467
    %469 = vmatmul.bf16.gmra.mxu0 %v286
    %v470 = vpop.f32.mrf.mxu0
    %v471 = vadd.f32 %v309, %v470
    %v472 = vpop.f32.mrf.mxu0
    %v473 = vadd.f32 %v309, %v472
    %474 = vmatmul.bf16.gmra.mxu0 %v287
    %v475 = vpop.f32.mrf.mxu0
    %v476 = vadd.f32 %v309, %v475
    %v477 = vpop.f32.mrf.mxu0
    %v478 = vadd.f32 %v309, %v477
    %479 = vmatmul.bf16.gmra.mxu0 %v288
    %v480 = vpop.f32.mrf.mxu0
    %v481 = vadd.f32 %v309, %v480
    %v482 = vpop.f32.mrf.mxu0
    %v483 = vadd.f32 %v309, %v482
    %484 = vmatmul.bf16.gmra.mxu0 %v289
    %v485 = vpop.f32.mrf.mxu0
    %v486 = vadd.f32 %v309, %v485
    %v487 = vpop.f32.mrf.mxu0
    %v488 = vadd.f32 %v309, %v487
    %489 = vdwg.mxu0
    %v490 = vld [vmem:[#allocation2] sm:$0xf]
    %v491 = vld [vmem:[#allocation2 + $0x4] sm:$0xf]
    %v492 = vld [vmem:[#allocation2 + $0x8] sm:$0xf]
    %v493 = vld [vmem:[#allocation2 + $0xc] sm:$0xf]
    %v494 = vld [vmem:[#allocation2 + $0x10] sm:$0xf]
    %v495 = vld [vmem:[#allocation2 + $0x14] sm:$0xf]
    %v496 = vld [vmem:[#allocation2 + $0x18] sm:$0xf]
    %v497 = vld [vmem:[#allocation2 + $0x1c] sm:$0xf]
    %v498 = vld [vmem:[#allocation2 + $0x20] sm:$0xf]
    %v499 = vld [vmem:[#allocation2 + $0x24] sm:$0xf]
    %v500 = vld [vmem:[#allocation2 + $0x28] sm:$0xf]
    %v501 = vld [vmem:[#allocation2 + $0x2c] sm:$0xf]
    %v502 = vld [vmem:[#allocation2 + $0x30] sm:$0xf]
    %v503 = vld [vmem:[#allocation2 + $0x34] sm:$0xf]
    %v504 = vld [vmem:[#allocation2 + $0x38] sm:$0xf]
    %v505 = vld [vmem:[#allocation2 + $0x3c] sm:$0xf]
    %v506 = vpack.c.bf16 %v404, %v402
    %v507 = vpack.c.bf16 %v409, %v407
    %v508 = vpack.c.bf16 %v414, %v412
    %v509 = vpack.c.bf16 %v419, %v417
    %v510 = vpack.c.bf16 %v424, %v422
    %v511 = vpack.c.bf16 %v429, %v427
    %v512 = vpack.c.bf16 %v434, %v432
    %v513 = vpack.c.bf16 %v439, %v437
    %v530 = vunpack.c.l.b16 %v490
    %v531 = vunpack.c.l.b16 %v491
    %v532 = vunpack.c.l.b16 %v492
    %v533 = vunpack.c.l.b16 %v493
    %v534 = vunpack.c.l.b16 %v494
    %v535 = vunpack.c.l.b16 %v495
    %v536 = vunpack.c.l.b16 %v496
    %v537 = vunpack.c.l.b16 %v497
    %v538 = vunpack.c.l.b16 %v498
    %v539 = vunpack.c.l.b16 %v499
    %v540 = vunpack.c.l.b16 %v500
    %v541 = vunpack.c.l.b16 %v501
    %v542 = vunpack.c.l.b16 %v502
    %v543 = vunpack.c.l.b16 %v503
    %v544 = vunpack.c.l.b16 %v504
    %v545 = vunpack.c.l.b16 %v505
    %v546 = vpack.c.b16 %v531, %v530
    %v547 = vpack.c.b16 %v533, %v532
    %v548 = vpack.c.b16 %v535, %v534
    %v549 = vpack.c.b16 %v537, %v536
    %v550 = vpack.c.b16 %v539, %v538
    %v551 = vpack.c.b16 %v541, %v540
    %v552 = vpack.c.b16 %v543, %v542
    %v553 = vpack.c.b16 %v545, %v544
    %562 = vmatpush.bf16.xpose.msra.mxu0 %v513
    %563 = vmatpush.bf16.xpose.msra.mxu0 %v512
    %564 = vmatpush.bf16.xpose.msra.mxu0 %v511
    %565 = vmatpush.bf16.xpose.msra.mxu0 %v510
    %566 = vmatpush.bf16.xpose.msra.mxu0 %v509
    %567 = vmatpush.bf16.xpose.msra.mxu0 %v508
    %568 = vmatpush.bf16.xpose.msra.mxu0 %v507
    %569 = vmatpush.bf16.xpose.msra.mxu0 %v506
    %570 = vmatmul.bf16.gmra.mxu0 %v546
    %v571 = vpop.f32.mrf.mxu0
    %v572 = vadd.f32 0.0, %v571
    %v573 = vpop.f32.mrf.mxu0
    %v574 = vadd.f32 0.0, %v573
    %575 = vmatmul.bf16.gmra.mxu0 %v547
    %v576 = vpop.f32.mrf.mxu0
    %v577 = vadd.f32 0.0, %v576
    %v578 = vpop.f32.mrf.mxu0
    %v579 = vadd.f32 0.0, %v578
    %580 = vmatmul.bf16.gmra.mxu0 %v548
    %v581 = vpop.f32.mrf.mxu0
    %v582 = vadd.f32 0.0, %v581
    %v583 = vpop.f32.mrf.mxu0
    %v584 = vadd.f32 0.0, %v583
    %585 = vmatmul.bf16.gmra.mxu0 %v549
    %v586 = vpop.f32.mrf.mxu0
    %v587 = vadd.f32 0.0, %v586
    %v588 = vpop.f32.mrf.mxu0
    %v589 = vadd.f32 0.0, %v588
    %590 = vmatmul.bf16.gmra.mxu0 %v550
    %v591 = vpop.f32.mrf.mxu0
    %v592 = vadd.f32 0.0, %v591
    %v593 = vpop.f32.mrf.mxu0
    %v594 = vadd.f32 0.0, %v593
    %595 = vmatmul.bf16.gmra.mxu0 %v551
    %v596 = vpop.f32.mrf.mxu0
    %v597 = vadd.f32 0.0, %v596
    %v598 = vpop.f32.mrf.mxu0
    %v599 = vadd.f32 0.0, %v598
    %600 = vmatmul.bf16.gmra.mxu0 %v552
    %v601 = vpop.f32.mrf.mxu0
    %v602 = vadd.f32 0.0, %v601
    %v603 = vpop.f32.mrf.mxu0
    %v604 = vadd.f32 0.0, %v603
    %605 = vmatmul.bf16.gmra.mxu0 %v553
    %v606 = vpop.f32.mrf.mxu0
    %v607 = vadd.f32 0.0, %v606
    %v608 = vpop.f32.mrf.mxu0
    %v609 = vadd.f32 0.0, %v608
    %610 = vdwg.mxu0
    %v611 = vmul.f32 %v572, 0.17677669
    %v612 = vmul.f32 %v574, 0.17677669
    %v613 = vmul.f32 %v577, 0.17677669
    %v614 = vmul.f32 %v579, 0.17677669
    %v615 = vmul.f32 %v582, 0.17677669
    %v616 = vmul.f32 %v584, 0.17677669
    %v617 = vmul.f32 %v587, 0.17677669
    %v618 = vmul.f32 %v589, 0.17677669
    %v619 = vmul.f32 %v592, 0.17677669
    %v620 = vmul.f32 %v594, 0.17677669
    %v621 = vmul.f32 %v597, 0.17677669
    %v622 = vmul.f32 %v599, 0.17677669
    %v623 = vmul.f32 %v602, 0.17677669
    %v624 = vmul.f32 %v604, 0.17677669
    %v625 = vmul.f32 %v607, 0.17677669
    %v626 = vmul.f32 %v609, 0.17677669
    %v627 = vlaneseq
    %v628 = vshrl.u32 %v627, 7
    %v629 = vadd.s32 %v628, 8
    %v630 = vadd.s32 %v628, 16
    %v631 = vadd.s32 %v628, 24
    %v632 = vadd.s32 %v628, 32
    %v633 = vadd.s32 %v628, 40
    %v634 = vadd.s32 %v628, 48
    %v635 = vadd.s32 %v628, 56
    %v636 = vadd.s32 %v628, 64
    %v637 = vadd.s32 %v628, 72
    %v638 = vadd.s32 %v628, 80
    %v639 = vadd.s32 %v628, 88
    %v640 = vadd.s32 %v628, 96
    %v641 = vadd.s32 %v628, 104
    %v642 = vadd.s32 %v628, 112
    %v643 = vadd.s32 %v628, 120
    %vm644 = vcmp.lt.s32.totalorder %v628, 8
    %vm645 = vcmp.lt.s32.totalorder %v629, 8
    %vm646 = vcmp.lt.s32.totalorder %v630, 8
    %vm647 = vcmp.lt.s32.totalorder %v631, 8
    %vm648 = vcmp.lt.s32.totalorder %v632, 8
    %vm649 = vcmp.lt.s32.totalorder %v633, 8
    %vm650 = vcmp.lt.s32.totalorder %v634, 8
    %vm651 = vcmp.lt.s32.totalorder %v635, 8
    %vm652 = vcmp.lt.s32.totalorder %v636, 8
    %vm653 = vcmp.lt.s32.totalorder %v637, 8
    %vm654 = vcmp.lt.s32.totalorder %v638, 8
    %vm655 = vcmp.lt.s32.totalorder %v639, 8
    %vm656 = vcmp.lt.s32.totalorder %v640, 8
    %vm657 = vcmp.lt.s32.totalorder %v641, 8
    %vm658 = vcmp.lt.s32.totalorder %v642, 8
    %vm659 = vcmp.lt.s32.totalorder %v643, 8
    %v660 = vsel %vm644, %v611, -1e+30
    %v661 = vsel %vm645, %v612, -1e+30
    %v662 = vsel %vm646, %v613, -1e+30
    %v663 = vsel %vm647, %v614, -1e+30
    %v664 = vsel %vm648, %v615, -1e+30
    %v665 = vsel %vm649, %v616, -1e+30
    %v666 = vsel %vm650, %v617, -1e+30
    %v667 = vsel %vm651, %v618, -1e+30
    %v668 = vsel %vm652, %v619, -1e+30
    %v669 = vsel %vm653, %v620, -1e+30
    %v670 = vsel %vm654, %v621, -1e+30
    %v671 = vsel %vm655, %v622, -1e+30
    %v672 = vsel %vm656, %v623, -1e+30
    %v673 = vsel %vm657, %v624, -1e+30
    %v674 = vsel %vm658, %v625, -1e+30
    %v675 = vsel %vm659, %v626, -1e+30
    %v676 = vmax.f32 %v660, %v664
    %v677 = vmax.f32 %v661, %v665
    %v678 = vmax.f32 %v662, %v666
    %v679 = vmax.f32 %v663, %v667
    %v680 = vmax.f32 %v676, %v668
    %v681 = vmax.f32 %v677, %v669
    %v682 = vmax.f32 %v678, %v670
    %v683 = vmax.f32 %v679, %v671
    %v684 = vmax.f32 %v680, %v672
    %v685 = vmax.f32 %v681, %v673
    %v686 = vmax.f32 %v682, %v674
    %v687 = vmax.f32 %v683, %v675
    %v688 = vmax.f32 %v684, %v685
    %v689 = vmax.f32 %v686, %v687
    %v690 = vmax.f32 %v688, %v689
    %v691 = vrot.slane %v690, 4
    %v692 = vmax.f32 %v690, %v691
    %v693 = vrot.slane %v692, 2
    %v694 = vmax.f32 %v692, %v693
    %v695 = vrot.slane %v694, 1
    %v696 = vmax.f32 %v694, %v695
    %v697 = vsub.f32 %v660, %v696
    %v698 = vsub.f32 %v661, %v696
    %v699 = vsub.f32 %v662, %v696
    %v700 = vsub.f32 %v663, %v696
    %v701 = vsub.f32 %v664, %v696
    %v702 = vsub.f32 %v665, %v696
    %v703 = vsub.f32 %v666, %v696
    %v704 = vsub.f32 %v667, %v696
    %v705 = vsub.f32 %v668, %v696
    %v706 = vsub.f32 %v669, %v696
    %v707 = vsub.f32 %v670, %v696
    %v708 = vsub.f32 %v671, %v696
    %v709 = vsub.f32 %v672, %v696
    %v710 = vsub.f32 %v673, %v696
    %v711 = vsub.f32 %v674, %v696
    %v712 = vsub.f32 %v675, %v696
    %v713 = vmul.f32 %v697, 1.442695
    %v714 = vpow.pop %v713
    %v715 = vmul.f32 %v698, 1.442695
    %v716 = vpow.pop %v715
    %v717 = vmul.f32 %v699, 1.442695
    %v718 = vpow.pop %v717
    %v719 = vmul.f32 %v700, 1.442695
    %v720 = vpow.pop %v719
    %v721 = vmul.f32 %v701, 1.442695
    %v722 = vpow.pop %v721
    %v723 = vmul.f32 %v702, 1.442695
    %v724 = vpow.pop %v723
    %v725 = vmul.f32 %v703, 1.442695
    %v726 = vpow.pop %v725
    %v727 = vmul.f32 %v704, 1.442695
    %v728 = vpow.pop %v727
    %v729 = vmul.f32 %v705, 1.442695
    %v730 = vpow.pop %v729
    %v731 = vmul.f32 %v706, 1.442695
    %v732 = vpow.pop %v731
    %v733 = vmul.f32 %v707, 1.442695
    %v734 = vpow.pop %v733
    %v735 = vmul.f32 %v708, 1.442695
    %v736 = vpow.pop %v735
    %v737 = vmul.f32 %v709, 1.442695
    %v738 = vpow.pop %v737
    %v739 = vmul.f32 %v710, 1.442695
    %v740 = vpow.pop %v739
    %v741 = vmul.f32 %v711, 1.442695
    %v742 = vpow.pop %v741
    %v743 = vmul.f32 %v712, 1.442695
    %v744 = vpow.pop %v743
    %v745 = vadd.f32 %v714, %v716
    %v746 = vadd.f32 %v745, %v718
    %v747 = vadd.f32 %v746, %v720
    %v748 = vadd.f32 %v747, %v722
    %v749 = vadd.f32 %v748, %v724
    %v750 = vadd.f32 %v749, %v726
    %v751 = vadd.f32 %v750, %v728
    %v752 = vadd.f32 %v751, %v730
    %v753 = vadd.f32 %v752, %v732
    %v754 = vadd.f32 %v753, %v734
    %v755 = vadd.f32 %v754, %v736
    %v756 = vadd.f32 %v755, %v738
    %v757 = vadd.f32 %v756, %v740
    %v758 = vadd.f32 %v757, %v742
    %v759 = vadd.f32 %v758, %v744
    %v760 = vrot.slane %v759, 4
    %v761 = vadd.f32 %v759, %v760
    %v762 = vrot.slane %v761, 2
    %v763 = vadd.f32 %v761, %v762
    %v764 = vrot.slane %v763, 1
    %v765 = vadd.f32 %v763, %v764
    %v766 = vrcp.pop %v765
    %v767 = vmul.f32 %v765, %v766
    %v768 = vsub.f32 1.0, %v767
    %v769 = vmul.f32 %v766, %v768
    %v770 = vadd.f32 %v766, %v769
    %vm771 = vweird.f32 %v765
    %vm772 = vweird.f32 %v766
    %vm773 = vmor %vm771, %vm772
    %v774 = vsel %vm773, %v766, %v770
    %v775 = vand.u32 2147483647, %v765
    %vm776 = vcmp.eq.f32.partialorder %v775, 8.507059e+37
    %v777 = vand.u32 %v765, 2147483648
    %v778 = vor.u32 1.1754944e-38, %v777
    %v779 = vsel %vm776, %v778, %v774
    %v780 = vmul.f32 %v714, %v779
    %v781 = vmul.f32 %v716, %v779
    %v782 = vmul.f32 %v718, %v779
    %v783 = vmul.f32 %v720, %v779
    %v784 = vmul.f32 %v722, %v779
    %v785 = vmul.f32 %v724, %v779
    %v786 = vmul.f32 %v726, %v779
    %v787 = vmul.f32 %v728, %v779
    %v788 = vmul.f32 %v730, %v779
    %v789 = vmul.f32 %v732, %v779
    %v790 = vmul.f32 %v734, %v779
    %v791 = vmul.f32 %v736, %v779
    %v792 = vmul.f32 %v738, %v779
    %v793 = vmul.f32 %v740, %v779
    %v794 = vmul.f32 %v742, %v779
    %v795 = vmul.f32 %v744, %v779
    %v796 = vlaneseq
    %v797 = vand.u32 %v796, 127
    %v798 = vstv %s264
    %v799 = vadd.s32 %v797, %v798
    %vm800 = vcmp.lt.s32.totalorder %v799, 8
    %v801 = vsel %vm800, %v780, 0.0
    %v802 = vsel %vm800, %v781, 0.0
    %v803 = vsel %vm800, %v782, 0.0
    %v804 = vsel %vm800, %v783, 0.0
    %v805 = vsel %vm800, %v784, 0.0
    %v806 = vsel %vm800, %v785, 0.0
    %v807 = vsel %vm800, %v786, 0.0
    %v808 = vsel %vm800, %v787, 0.0
    %v809 = vsel %vm800, %v788, 0.0
    %v810 = vsel %vm800, %v789, 0.0
    %v811 = vsel %vm800, %v790, 0.0
    %v812 = vsel %vm800, %v791, 0.0
    %v813 = vsel %vm800, %v792, 0.0
    %v814 = vsel %vm800, %v793, 0.0
    %v815 = vsel %vm800, %v794, 0.0
    %v816 = vsel %vm800, %v795, 0.0
    %817 = vst [vmem:[#allocation10] sm:$0xff] %v801
    %818 = vst [vmem:[#allocation10 + $0x8] sm:$0xff] %v802
    %819 = vst [vmem:[#allocation10 + $0x10] sm:$0xff] %v803
    %820 = vst [vmem:[#allocation10 + $0x18] sm:$0xff] %v804
    %821 = vst [vmem:[#allocation10 + $0x20] sm:$0xff] %v805
    %822 = vst [vmem:[#allocation10 + $0x28] sm:$0xff] %v806
    %823 = vst [vmem:[#allocation10 + $0x30] sm:$0xff] %v807
    %824 = vst [vmem:[#allocation10 + $0x38] sm:$0xff] %v808
    %825 = vst [vmem:[#allocation10 + $0x40] sm:$0xff] %v809
    %826 = vst [vmem:[#allocation10 + $0x48] sm:$0xff] %v810
    %827 = vst [vmem:[#allocation10 + $0x50] sm:$0xff] %v811
    %828 = vst [vmem:[#allocation10 + $0x58] sm:$0xff] %v812
    %829 = vst [vmem:[#allocation10 + $0x60] sm:$0xff] %v813
    %830 = vst [vmem:[#allocation10 + $0x68] sm:$0xff] %v814
    %831 = vst [vmem:[#allocation10 + $0x70] sm:$0xff] %v815
    %832 = vst [vmem:[#allocation10 + $0x78] sm:$0xff] %v816
    %v833 = vld [vmem:[#allocation9] sm:$0xff]
    %v834 = vld [vmem:[#allocation9 + $0x8] sm:$0xff]
    %v835 = vld [vmem:[#allocation9 + $0x10] sm:$0xff]
    %v836 = vld [vmem:[#allocation9 + $0x18] sm:$0xff]
    %v837 = vld [vmem:[#allocation9 + $0x20] sm:$0xff]
    %v838 = vld [vmem:[#allocation9 + $0x28] sm:$0xff]
    %v839 = vld [vmem:[#allocation9 + $0x30] sm:$0xff]
    %v840 = vld [vmem:[#allocation9 + $0x38] sm:$0xff]
    %v841 = vld [vmem:[#allocation9 + $0x40] sm:$0xff]
    %v842 = vld [vmem:[#allocation9 + $0x48] sm:$0xff]
    %v843 = vld [vmem:[#allocation9 + $0x50] sm:$0xff]
    %v844 = vld [vmem:[#allocation9 + $0x58] sm:$0xff]
    %v845 = vld [vmem:[#allocation9 + $0x60] sm:$0xff]
    %v846 = vld [vmem:[#allocation9 + $0x68] sm:$0xff]
    %v847 = vld [vmem:[#allocation9 + $0x70] sm:$0xff]
    %v848 = vld [vmem:[#allocation9 + $0x78] sm:$0xff]
    %v849 = vpack.c.bf16 %v802, %v801
    %v850 = vpack.c.bf16 %v804, %v803
    %v851 = vpack.c.bf16 %v806, %v805
    %v852 = vpack.c.bf16 %v808, %v807
    %v853 = vpack.c.bf16 %v810, %v809
    %v854 = vpack.c.bf16 %v812, %v811
    %v855 = vpack.c.bf16 %v814, %v813
    %v856 = vpack.c.bf16 %v816, %v815
    %v857 = vpack.c.bf16 %v453, %v451
    %v858 = vpack.c.bf16 %v458, %v456
    %v859 = vpack.c.bf16 %v463, %v461
    %v860 = vpack.c.bf16 %v468, %v466
    %v861 = vpack.c.bf16 %v473, %v471
    %v862 = vpack.c.bf16 %v478, %v476
    %v863 = vpack.c.bf16 %v483, %v481
    %v864 = vpack.c.bf16 %v488, %v486
    %865 = vmatpush.bf16.msra.mxu0 %v864
    %866 = vmatpush.bf16.msra.mxu0 %v863
    %867 = vmatpush.bf16.msra.mxu0 %v862
    %868 = vmatpush.bf16.msra.mxu0 %v861
    %869 = vmatpush.bf16.msra.mxu0 %v860
    %870 = vmatpush.bf16.msra.mxu0 %v859
    %871 = vmatpush.bf16.msra.mxu0 %v858
    %872 = vmatpush.bf16.msra.mxu0 %v857
    %873 = vmatmul.bf16.gmra.mxu0 %v849
    %v874 = vpop.f32.mrf.mxu0
    %v875 = vadd.f32 0.0, %v874
    %v876 = vpop.f32.mrf.mxu0
    %v877 = vadd.f32 0.0, %v876
    %878 = vmatmul.bf16.gmra.mxu0 %v850
    %v879 = vpop.f32.mrf.mxu0
    %v880 = vadd.f32 0.0, %v879
    %v881 = vpop.f32.mrf.mxu0
    %v882 = vadd.f32 0.0, %v881
    %883 = vmatmul.bf16.gmra.mxu0 %v851
    %v884 = vpop.f32.mrf.mxu0
    %v885 = vadd.f32 0.0, %v884
    %v886 = vpop.f32.mrf.mxu0
    %v887 = vadd.f32 0.0, %v886
    %888 = vmatmul.bf16.gmra.mxu0 %v852
    %v889 = vpop.f32.mrf.mxu0
    %v890 = vadd.f32 0.0, %v889
    %v891 = vpop.f32.mrf.mxu0
    %v892 = vadd.f32 0.0, %v891
    %893 = vmatmul.bf16.gmra.mxu0 %v853
    %v894 = vpop.f32.mrf.mxu0
    %v895 = vadd.f32 0.0, %v894
    %v896 = vpop.f32.mrf.mxu0
    %v897 = vadd.f32 0.0, %v896
    %898 = vmatmul.bf16.gmra.mxu0 %v854
    %v899 = vpop.f32.mrf.mxu0
    %v900 = vadd.f32 0.0, %v899
    %v901 = vpop.f32.mrf.mxu0
    %v902 = vadd.f32 0.0, %v901
    %903 = vmatmul.bf16.gmra.mxu0 %v855
    %v904 = vpop.f32.mrf.mxu0
    %v905 = vadd.f32 0.0, %v904
    %v906 = vpop.f32.mrf.mxu0
    %v907 = vadd.f32 0.0, %v906
    %908 = vmatmul.bf16.gmra.mxu0 %v856
    %v909 = vpop.f32.mrf.mxu0
    %v910 = vadd.f32 0.0, %v909
    %v911 = vpop.f32.mrf.mxu0
    %v912 = vadd.f32 0.0, %v911
    %913 = vdwg.mxu0
    %v914 = vadd.f32 %v833, %v875
    %v915 = vadd.f32 %v834, %v877
    %v916 = vadd.f32 %v835, %v880
    %v917 = vadd.f32 %v836, %v882
    %v918 = vadd.f32 %v837, %v885
    %v919 = vadd.f32 %v838, %v887
    %v920 = vadd.f32 %v839, %v890
    %v921 = vadd.f32 %v840, %v892
    %v922 = vadd.f32 %v841, %v895
    %v923 = vadd.f32 %v842, %v897
    %v924 = vadd.f32 %v843, %v900
    %v925 = vadd.f32 %v844, %v902
    %v926 = vadd.f32 %v845, %v905
    %v927 = vadd.f32 %v846, %v907
    %v928 = vadd.f32 %v847, %v910
    %v929 = vadd.f32 %v848, %v912
    %930 = vst [vmem:[#allocation9] sm:$0xff] %v914
    %931 = vst [vmem:[#allocation9 + $0x8] sm:$0xff] %v915
    %932 = vst [vmem:[#allocation9 + $0x10] sm:$0xff] %v916
    %933 = vst [vmem:[#allocation9 + $0x18] sm:$0xff] %v917
    %934 = vst [vmem:[#allocation9 + $0x20] sm:$0xff] %v918
    %935 = vst [vmem:[#allocation9 + $0x28] sm:$0xff] %v919
    %936 = vst [vmem:[#allocation9 + $0x30] sm:$0xff] %v920
    %937 = vst [vmem:[#allocation9 + $0x38] sm:$0xff] %v921
    %938 = vst [vmem:[#allocation9 + $0x40] sm:$0xff] %v922
    %939 = vst [vmem:[#allocation9 + $0x48] sm:$0xff] %v923
    %940 = vst [vmem:[#allocation9 + $0x50] sm:$0xff] %v924
    %941 = vst [vmem:[#allocation9 + $0x58] sm:$0xff] %v925
    %942 = vst [vmem:[#allocation9 + $0x60] sm:$0xff] %v926
    %943 = vst [vmem:[#allocation9 + $0x68] sm:$0xff] %v927
    %944 = vst [vmem:[#allocation9 + $0x70] sm:$0xff] %v928
    %945 = vst [vmem:[#allocation9 + $0x78] sm:$0xff] %v929
    // Predicated region
    $region38: #{tpu_custom_call.1} parent=1 // pred_check
      _
    $region39: #{tpu_custom_call.1} parent=1 // pred_check_branch
      %947 = sbr.rel (0) target = $region41
    $region40: #{tpu_custom_call.1} parent=1 // pred_region
      %949 = vsyncadd [#allocation5], 0
      %s950 = sshll.u32 [#allocation9], 4
      %s951 = int_to_ptr.vmem [resolvable:$true] %s950
      %s952 = sshll.u32 %s5, 4
      %s953 = int_to_ptr.hbm [resolvable:$true] %s952
      %958 = dma.vmem_to_hbm [thread:$0]  %s951, 2048, %s953, [#allocation5], 128, 128, 8
    $region41: #{tpu_custom_call.1} parent=1 // pred_fallthru
      _
    // Predicated region
    $region42: #{tpu_custom_call.1} parent=1 // pred_check
      _
    $region43: #{tpu_custom_call.1} parent=1 // pred_check_branch
      %960 = sbr.rel (0) target = $region45
    $region44: #{tpu_custom_call.1} parent=1 // pred_region
      %962 = vsyncadd [#allocation11], 0
      %s963 = sshll.u32 [#allocation10], 4
      %s964 = int_to_ptr.vmem [resolvable:$true] %s963
      %s965 = sshll.u32 %s6, 4
      %s966 = int_to_ptr.hbm [resolvable:$true] %s965
      %971 = dma.vmem_to_hbm [thread:$0]  %s964, 2048, %s966, [#allocation11], 128, 128, 8
    $region45: #{tpu_custom_call.1} parent=1 // pred_fallthru
      _
    // Predicated region
    $region46: #{tpu_custom_call.1} parent=1 // pred_check
      _
    $region47: #{tpu_custom_call.1} parent=1 // pred_check_branch
      %973 = sbr.rel (0) target = $region49
    $region48: #{tpu_custom_call.1} parent=1 // pred_region
      %975 = dma.done [#allocation5], 2048
    $region49: #{tpu_custom_call.1} parent=1 // pred_fallthru
      _
    // Predicated region
    $region50: #{tpu_custom_call.1} parent=1 // pred_check
      _
    $region51: #{tpu_custom_call.1} parent=1 // pred_check_branch
      %977 = sbr.rel (0) target = $region53
    $region52: #{tpu_custom_call.1} parent=1 // pred_region
      %979 = dma.done [#allocation11], 2048
    $region53: #{tpu_custom_call.1} parent=1 // pred_fallthru
      _
    %980 = vsyncpa [#allocation4], 1
    %981 = vsyncpa [#allocation7], 1
    %982 = vsyncpa [#allocation5], 1
    %983 = vsyncpa [#allocation11], 1

</llo_original>
